<compile_context>
chip_gen: v5e
topology: v5e:2x2
jax: 0.10.0
libtpu: 0.0.40
codegen_flags: <defaults>
</compile_context>

<pallas_src>
import math
import functools

import jax
import jax.numpy as jnp
from jax import lax
from jax.experimental import pallas as pl
from jax.experimental.pallas import tpu as pltpu  # noqa: F401 (kept for TPU lowering)

# ----------------------------- configuration --------------------------------
BS = 2           # batch
LQ = 8           # query (tgt) length
LK = 16          # key/value (memory) length
D_MODEL = 32
N_HEADS = 4
D_HEAD = D_MODEL // N_HEADS
D_FF = 64
LN_EPS = 1e-5


# ------------------------------- kernel -------------------------------------
def _v2q_kernel(bs, lq, lk, d, n_heads, d_head, d_ff,
                tgt_ref, mem_ref, qpos_ref, pos_ref, mask_ref,
                wslab_ref, w2_ref, bslab_ref,
                out_ref, att_ref):
    f32 = jnp.float32

    # ---- unpack packed parameters (static, tile-aligned slices) ----
    wq = wslab_ref[:, 0 * d:1 * d]
    wk = wslab_ref[:, 1 * d:2 * d]
    wv = wslab_ref[:, 2 * d:3 * d]
    wo = wslab_ref[:, 3 * d:4 * d]
    w1 = wslab_ref[:, 4 * d:4 * d + d_ff]
    w2 = w2_ref[...]

    o = 0
    bq = bslab_ref[:, o:o + d]; o += d
    bk = bslab_ref[:, o:o + d]; o += d
    bv = bslab_ref[:, o:o + d]; o += d
    bo = bslab_ref[:, o:o + d]; o += d
    g2 = bslab_ref[:, o:o + d]; o += d
    be2 = bslab_ref[:, o:o + d]; o += d
    b1 = bslab_ref[:, o:o + d_ff]; o += d_ff
    b2 = bslab_ref[:, o:o + d]; o += d
    g3 = bslab_ref[:, o:o + d]; o += d
    be3 = bslab_ref[:, o:o + d]; o += d

    # ---- row-wise QKV projections on the flattened (bs*seq, d) slabs ----
    tgt = tgt_ref[...].astype(f32)            # (bs*lq, d)
    mem = mem_ref[...].astype(f32)            # (bs*lk, d)
    q_in = tgt + qpos_ref[...]
    k_in = mem + pos_ref[...]

    q = jnp.dot(q_in, wq, preferred_element_type=f32) + bq
    k = jnp.dot(k_in, wk, preferred_element_type=f32) + bk
    v = jnp.dot(mem, wv, preferred_element_type=f32) + bv
    q = q * (1.0 / math.sqrt(d_head))         # scale hoisted out of head loop

    inv_heads = 1.0 / n_heads
    dn = (((1,), (1,)), ((), ()))             # contract last dims, no transpose

    ctx_rows = []
    for b in range(bs):                       # static batch loop (rows sliced)
        qb = q[b * lq:(b + 1) * lq, :]        # (lq, d)
        kb = k[b * lk:(b + 1) * lk, :]        # (lk, d)
        vb = v[b * lk:(b + 1) * lk, :]        # (lk, d)
        bias_b = mask_ref[b:b + 1, :]         # (1, lk): 0.0 keep / -1e30 pad

        att_acc = jnp.zeros((lq, lk), f32)
        ctx_acc = jnp.zeros((lq, d), f32)     # output projection fused per head
        for h in range(n_heads):              # static head loop, static slices
            lo = h * d_head
            hi = lo + d_head
            s = lax.dot_general(qb[:, lo:hi], kb[:, lo:hi], dn,
                                preferred_element_type=f32) + bias_b
            s = s - jnp.max(s, axis=-1, keepdims=True)
            p = jnp.exp(s)
            denom = jnp.sum(p, axis=-1, keepdims=True)
            inv = pl.reciprocal(denom, approx=True)      # EUP reciprocal
            inv = inv * (2.0 - denom * inv)              # one Newton step -> f32
            w = p * inv                                  # softmax over keys
            att_acc = att_acc + w
            ctx_h = jnp.dot(w, vb[:, lo:hi], preferred_element_type=f32)
            ctx_acc = ctx_acc + jnp.dot(ctx_h, wo[lo:hi, :],
                                        preferred_element_type=f32)

        att_ref[b] = (att_acc * inv_heads).astype(att_ref.dtype)
        ctx_rows.append(ctx_acc)

    attn_out = jnp.concatenate(ctx_rows, axis=0) + bo     # (bs*lq, d)

    # ---- residual + LayerNorm2 (dropout2 = identity, eval) ----
    x = tgt + attn_out
    mu = jnp.mean(x, axis=-1, keepdims=True)
    var = jnp.mean((x - mu) ** 2, axis=-1, keepdims=True)
    x = (x - mu) * lax.rsqrt(var + LN_EPS) * g2 + be2

    # ---- feed-forward (relu) + residual + LayerNorm3 ----
    h1 = jnp.maximum(jnp.dot(x, w1, preferred_element_type=f32) + b1, 0.0)
    ff = jnp.dot(h1, w2, preferred_element_type=f32) + b2
    y = x + ff
    mu = jnp.mean(y, axis=-1, keepdims=True)
    var = jnp.mean((y - mu) ** 2, axis=-1, keepdims=True)
    y = (y - mu) * lax.rsqrt(var + LN_EPS) * g3 + be3

    out_ref[...] = y.astype(out_ref.dtype)


# ------------------------------ wrapper --------------------------------------
def v2q_catt_layer(tgt, memory, params, key_padding_mask=None,
                   pos=None, query_pos=None):
    bs, lq, d = tgt.shape
    lk = memory.shape[1]
    d_ff = params["w1"].shape[1]
    n_heads = N_HEADS
    d_head = d // n_heads

    qpos = jnp.zeros_like(tgt) if query_pos is None else query_pos
    kpos = jnp.zeros_like(memory) if pos is None else pos

    # Flatten row-wise operands so the kernel fills sublanes (bs*seq, d).
    tgt2d = tgt.reshape(bs * lq, d)
    mem2d = memory.reshape(bs * lk, d)
    qpos2d = qpos.reshape(bs * lq, d)
    pos2d = kpos.reshape(bs * lk, d)

    # key_padding_mask: bool (bs, lk), True = valid key.
    # Large finite negative bias instead of -inf (no NaN on fully-padded rows).
    if key_padding_mask is None:
        mask_bias = jnp.zeros((bs, lk), jnp.float32)
    else:
        mask_bias = jnp.where(key_padding_mask, 0.0, -1e30).astype(jnp.float32)

    # Pack the 16 parameter tensors into 3 contiguous slabs (3 DMAs, not 16).
    wslab = jnp.concatenate([params["wq"], params["wk"], params["wv"],
                             params["wo"], params["w1"]], axis=1)    # (d, 4d+d_ff)
    bslab = jnp.concatenate([params["bq"], params["bk"], params["bv"],
                             params["bo"], params["g2"], params["be2"],
                             params["b1"], params["b2"],
                             params["g3"], params["be3"]], axis=1)   # (1, 9d+d_ff)
    w2 = params["w2"]                                                # (d_ff, d)

    kernel = functools.partial(_v2q_kernel, bs, lq, lk, d, n_heads, d_head, d_ff)

    def full(shape):
        return pl.BlockSpec(shape, lambda i, _s=shape: tuple(0 for _ in _s))

    out2d, att = pl.pallas_call(
        kernel,
        out_shape=(jax.ShapeDtypeStruct((bs * lq, d), jnp.float32),
                   jax.ShapeDtypeStruct((bs, lq, lk), jnp.float32)),
        grid=(1,),                       # single invocation: whole problem in VMEM
        in_specs=[full((bs * lq, d)),    # tgt  (flattened)
                  full((bs * lk, d)),    # memory (flattened)
                  full((bs * lq, d)),    # query_pos
                  full((bs * lk, d)),    # pos
                  full((bs, lk)),        # mask bias
                  full(wslab.shape),     # packed weights Wq|Wk|Wv|Wo|W1
                  full(w2.shape),        # W2
                  full(bslab.shape)],    # packed biases / LN params
        out_specs=(full((bs * lq, d)), full((bs, lq, lk))),
    )(tgt2d, mem2d, qpos2d, pos2d, mask_bias, wslab, w2, bslab)

    return out2d.reshape(bs, lq, d), att


# --------------------------- pure-JAX reference ------------------------------
def _reference(tgt, memory, params, key_padding_mask, pos, query_pos):
    bs, lq, d = tgt.shape
    lk = memory.shape[1]
    q_in = tgt if query_pos is None else tgt + query_pos
    k_in = memory if pos is None else memory + pos

    q = q_in @ params["wq"] + params["bq"][0]
    k = k_in @ params["wk"] + params["bk"][0]
    v = memory @ params["wv"] + params["bv"][0]

    def shape_heads(x, L):
        return x.reshape(bs, L, N_HEADS, D_HEAD).transpose(0, 2, 1, 3)

    qh = shape_heads(q, lq) / math.sqrt(D_HEAD)
    kh = shape_heads(k, lk)
    vh = shape_heads(v, lk)
    scores = jnp.einsum("bhqd,bhkd->bhqk", qh, kh)
    if key_padding_mask is not None:
        scores = jnp.where(key_padding_mask[:, None, None, :], scores, -jnp.inf)
    w = jax.nn.softmax(scores, axis=-1)
    ctx = jnp.einsum("bhqk,bhkd->bhqd", w, vh)
    ctx = ctx.transpose(0, 2, 1, 3).reshape(bs, lq, d)
    ctx = ctx @ params["wo"] + params["bo"][0]
    att = w.mean(axis=1)

    def ln(x, g, b):
        mu = x.mean(-1, keepdims=True)
        var = ((x - mu) ** 2).mean(-1, keepdims=True)
        return (x - mu) / jnp.sqrt(var + LN_EPS) * g[0] + b[0]

    x = ln(tgt + ctx, params["g2"], params["be2"])
    ff = jnp.maximum(x @ params["w1"] + params["b1"][0], 0.0) @ params["w2"] \
        + params["b2"][0]
    y = ln(x + ff, params["g3"], params["be3"])
    return y, att


# --------------------------------- main --------------------------------------
if __name__ == "__main__":
    key = jax.random.PRNGKey(0)
    keys = jax.random.split(key, 16)

    def lin(kw, fan_in, fan_out, scale=0.05):
        # stored pre-transposed to (in, out) so kernel does x @ W + b
        return jax.random.normal(kw, (fan_in, fan_out), jnp.float32) * scale

    params = {
        "wq": lin(keys[0], D_MODEL, D_MODEL),
        "bq": jax.random.normal(keys[1], (1, D_MODEL), jnp.float32) * 0.01,
        "wk": lin(keys[2], D_MODEL, D_MODEL),
        "bk": jax.random.normal(keys[3], (1, D_MODEL), jnp.float32) * 0.01,
        "wv": lin(keys[4], D_MODEL, D_MODEL),
        "bv": jax.random.normal(keys[5], (1, D_MODEL), jnp.float32) * 0.01,
        "wo": lin(keys[6], D_MODEL, D_MODEL),
        "bo": jax.random.normal(keys[7], (1, D_MODEL), jnp.float32) * 0.01,
        "g2": jnp.ones((1, D_MODEL), jnp.float32),    # nn.LayerNorm default init
        "be2": jnp.zeros((1, D_MODEL), jnp.float32),
        "w1": lin(keys[8], D_MODEL, D_FF),
        "b1": jax.random.normal(keys[9], (1, D_FF), jnp.float32) * 0.01,
        "w2": lin(keys[10], D_FF, D_MODEL),
        "b2": jax.random.normal(keys[11], (1, D_MODEL), jnp.float32) * 0.01,
        "g3": jnp.ones((1, D_MODEL), jnp.float32),
        "be3": jnp.zeros((1, D_MODEL), jnp.float32),
    }

    tgt = jax.random.normal(keys[12], (BS, LQ, D_MODEL), jnp.float32)
    memory = jax.random.normal(keys[13], (BS, LK, D_MODEL), jnp.float32)
    query_pos = jax.random.normal(keys[14], (BS, LQ, D_MODEL), jnp.float32) * 0.1
    pos = jax.random.normal(keys[15], (BS, LK, D_MODEL), jnp.float32) * 0.1

    # key_padding_mask: True = valid key (last 4 keys of batch 1 are padded)
    key_padding_mask = jnp.ones((BS, LK), jnp.bool_)
    key_padding_mask = key_padding_mask.at[1, LK - 4:].set(False)

    out, att = v2q_catt_layer(tgt, memory, params,
                              key_padding_mask=key_padding_mask,
                              pos=pos, query_pos=query_pos)
    jax.block_until_ready((out, att))

    ref_out, ref_att = _reference(tgt, memory, params, key_padding_mask,
                                  pos, query_pos)
    assert jnp.allclose(out, ref_out, rtol=1e-4, atol=1e-4), "tgt mismatch"
    assert jnp.allclose(att, ref_att, rtol=1e-4, atol=1e-4), "att mismatch"

    print("KERNEL_OK")
</pallas_src>

<mosaic_0001>
module attributes {stable_mosaic.version = 11 : i64} {
  func.func @_v2q_kernel(%arg0: i32, %arg1: memref<16x32xf32, #tpu.memory_space<vmem>>, %arg2: memref<32x32xf32, #tpu.memory_space<vmem>>, %arg3: memref<16x32xf32, #tpu.memory_space<vmem>>, %arg4: memref<32x32xf32, #tpu.memory_space<vmem>>, %arg5: memref<2x16xf32, #tpu.memory_space<vmem>>, %arg6: memref<32x192xf32, #tpu.memory_space<vmem>>, %arg7: memref<64x32xf32, #tpu.memory_space<vmem>>, %arg8: memref<1x352xf32, #tpu.memory_space<vmem>>, %arg9: memref<16x32xf32, #tpu.memory_space<vmem>>, %arg10: memref<2x8x16xf32, #tpu.memory_space<vmem>>) attributes {dimension_semantics = [#tpu.dimension_semantics<arbitrary>], iteration_bounds = array<i64: 1>, scalar_prefetch = 0 : i64, scratch_operands = 0 : i64, tpu.core_type = #tpu.core_type<tc>, window_params = [{pipeline_mode = #tpu.pipeline_mode<synchronous>, transform_indices = @transform_0, window_bounds = array<i64: 16, 32>}, {pipeline_mode = #tpu.pipeline_mode<synchronous>, transform_indices = @transform_1, window_bounds = array<i64: 32, 32>}, {pipeline_mode = #tpu.pipeline_mode<synchronous>, transform_indices = @transform_2, window_bounds = array<i64: 16, 32>}, {pipeline_mode = #tpu.pipeline_mode<synchronous>, transform_indices = @transform_3, window_bounds = array<i64: 32, 32>}, {pipeline_mode = #tpu.pipeline_mode<synchronous>, transform_indices = @transform_4, window_bounds = array<i64: 2, 16>}, {pipeline_mode = #tpu.pipeline_mode<synchronous>, transform_indices = @transform_5, window_bounds = array<i64: 32, 192>}, {pipeline_mode = #tpu.pipeline_mode<synchronous>, transform_indices = @transform_6, window_bounds = array<i64: 64, 32>}, {pipeline_mode = #tpu.pipeline_mode<synchronous>, transform_indices = @transform_7, window_bounds = array<i64: 1, 352>}, {pipeline_mode = #tpu.pipeline_mode<synchronous>, transform_indices = @transform_8, window_bounds = array<i64: 16, 32>}, {pipeline_mode = #tpu.pipeline_mode<synchronous>, transform_indices = @transform_9, window_bounds = array<i64: 2, 8, 16>}]} {
    %c0 = arith.constant 0 : index
    %c0_0 = arith.constant 0 : index
    %0 = vector.load %arg6[%c0, %c0_0] : memref<32x192xf32, #tpu.memory_space<vmem>>, vector<32x32xf32>
    %c0_1 = arith.constant 0 : index
    %c32 = arith.constant 32 : index
    %1 = vector.load %arg6[%c0_1, %c32] : memref<32x192xf32, #tpu.memory_space<vmem>>, vector<32x32xf32>
    %c0_2 = arith.constant 0 : index
    %c64 = arith.constant 64 : index
    %2 = vector.load %arg6[%c0_2, %c64] : memref<32x192xf32, #tpu.memory_space<vmem>>, vector<32x32xf32>
    %c0_3 = arith.constant 0 : index
    %c96 = arith.constant 96 : index
    %3 = vector.load %arg6[%c0_3, %c96] : memref<32x192xf32, #tpu.memory_space<vmem>>, vector<32x32xf32>
    %c0_4 = arith.constant 0 : index
    %c128 = arith.constant 128 : index
    %4 = vector.load %arg6[%c0_4, %c128] : memref<32x192xf32, #tpu.memory_space<vmem>>, vector<32x64xf32>
    %c0_5 = arith.constant 0 : index
    %c0_6 = arith.constant 0 : index
    %5 = vector.load %arg7[%c0_5, %c0_6] : memref<64x32xf32, #tpu.memory_space<vmem>>, vector<64x32xf32>
    %c0_7 = arith.constant 0 : index
    %c0_8 = arith.constant 0 : index
    %6 = vector.load %arg8[%c0_7, %c0_8] : memref<1x352xf32, #tpu.memory_space<vmem>>, vector<1x32xf32>
    %c0_9 = arith.constant 0 : index
    %c32_10 = arith.constant 32 : index
    %7 = vector.load %arg8[%c0_9, %c32_10] : memref<1x352xf32, #tpu.memory_space<vmem>>, vector<1x32xf32>
    %c0_11 = arith.constant 0 : index
    %c64_12 = arith.constant 64 : index
    %8 = vector.load %arg8[%c0_11, %c64_12] : memref<1x352xf32, #tpu.memory_space<vmem>>, vector<1x32xf32>
    %c0_13 = arith.constant 0 : index
    %c96_14 = arith.constant 96 : index
    %9 = vector.load %arg8[%c0_13, %c96_14] : memref<1x352xf32, #tpu.memory_space<vmem>>, vector<1x32xf32>
    %c0_15 = arith.constant 0 : index
    %c128_16 = arith.constant 128 : index
    %10 = vector.load %arg8[%c0_15, %c128_16] : memref<1x352xf32, #tpu.memory_space<vmem>>, vector<1x32xf32>
    %c0_17 = arith.constant 0 : index
    %c160 = arith.constant 160 : index
    %11 = vector.load %arg8[%c0_17, %c160] : memref<1x352xf32, #tpu.memory_space<vmem>>, vector<1x32xf32>
    %c0_18 = arith.constant 0 : index
    %c192 = arith.constant 192 : index
    %12 = vector.load %arg8[%c0_18, %c192] : memref<1x352xf32, #tpu.memory_space<vmem>>, vector<1x64xf32>
    %c0_19 = arith.constant 0 : index
    %c256 = arith.constant 256 : index
    %13 = vector.load %arg8[%c0_19, %c256] : memref<1x352xf32, #tpu.memory_space<vmem>>, vector<1x32xf32>
    %c0_20 = arith.constant 0 : index
    %c288 = arith.constant 288 : index
    %14 = vector.load %arg8[%c0_20, %c288] : memref<1x352xf32, #tpu.memory_space<vmem>>, vector<1x32xf32>
    %c0_21 = arith.constant 0 : index
    %c320 = arith.constant 320 : index
    %15 = vector.load %arg8[%c0_21, %c320] : memref<1x352xf32, #tpu.memory_space<vmem>>, vector<1x32xf32>
    %c0_22 = arith.constant 0 : index
    %c0_23 = arith.constant 0 : index
    %16 = vector.load %arg1[%c0_22, %c0_23] : memref<16x32xf32, #tpu.memory_space<vmem>>, vector<16x32xf32>
    %c0_24 = arith.constant 0 : index
    %c0_25 = arith.constant 0 : index
    %17 = vector.load %arg2[%c0_24, %c0_25] : memref<32x32xf32, #tpu.memory_space<vmem>>, vector<32x32xf32>
    %c0_26 = arith.constant 0 : index
    %c0_27 = arith.constant 0 : index
    %18 = vector.load %arg3[%c0_26, %c0_27] : memref<16x32xf32, #tpu.memory_space<vmem>>, vector<16x32xf32>
    %19 = arith.addf %16, %18 : vector<16x32xf32>
    %c0_28 = arith.constant 0 : index
    %c0_29 = arith.constant 0 : index
    %20 = vector.load %arg4[%c0_28, %c0_29] : memref<32x32xf32, #tpu.memory_space<vmem>>, vector<32x32xf32>
    %21 = arith.addf %17, %20 : vector<32x32xf32>
    %cst = arith.constant dense<0.000000e+00> : vector<16x32xf32>
    %22 = tpu.matmul %19, %0, %cst {dimension_numbers = #tpu.dot_dimension_numbers<[1], [0], [0], [1], [0, 0, 1, 1], [], []>} : vector<16x32xf32>, vector<32x32xf32>, vector<16x32xf32> -> vector<16x32xf32>
    %23 = vector.broadcast %6 : vector<1x32xf32> to vector<16x32xf32>
    %24 = arith.addf %22, %23 : vector<16x32xf32>
    %cst_30 = arith.constant dense<0.000000e+00> : vector<32x32xf32>
    %25 = tpu.matmul %21, %1, %cst_30 {dimension_numbers = #tpu.dot_dimension_numbers<[1], [0], [0], [1], [0, 0, 1, 1], [], []>} : vector<32x32xf32>, vector<32x32xf32>, vector<32x32xf32> -> vector<32x32xf32>
    %26 = vector.broadcast %7 : vector<1x32xf32> to vector<32x32xf32>
    %27 = arith.addf %25, %26 : vector<32x32xf32>
    %cst_31 = arith.constant dense<0.000000e+00> : vector<32x32xf32>
    %28 = tpu.matmul %17, %2, %cst_31 {dimension_numbers = #tpu.dot_dimension_numbers<[1], [0], [0], [1], [0, 0, 1, 1], [], []>} : vector<32x32xf32>, vector<32x32xf32>, vector<32x32xf32> -> vector<32x32xf32>
    %29 = vector.broadcast %8 : vector<1x32xf32> to vector<32x32xf32>
    %30 = arith.addf %28, %29 : vector<32x32xf32>
    %cst_32 = arith.constant 0.353553385 : f32
    %31 = vector.broadcast %cst_32 : f32 to vector<16x32xf32>
    %32 = arith.mulf %24, %31 : vector<16x32xf32>
    %33 = vector.extract_strided_slice %32 {offsets = [0, 0], sizes = [8, 32], strides = [1, 1]} : vector<16x32xf32> to vector<8x32xf32>
    %34 = vector.extract_strided_slice %27 {offsets = [0, 0], sizes = [16, 32], strides = [1, 1]} : vector<32x32xf32> to vector<16x32xf32>
    %35 = vector.extract_strided_slice %30 {offsets = [0, 0], sizes = [16, 32], strides = [1, 1]} : vector<32x32xf32> to vector<16x32xf32>
    %c0_33 = arith.constant 0 : index
    %c0_34 = arith.constant 0 : index
    %36 = vector.load %arg5[%c0_33, %c0_34] : memref<2x16xf32, #tpu.memory_space<vmem>>, vector<1x16xf32>
    %cst_35 = arith.constant 0.000000e+00 : f32
    %37 = vector.broadcast %cst_35 : f32 to vector<8x16xf32>
    %cst_36 = arith.constant 0.000000e+00 : f32
    %38 = vector.broadcast %cst_36 : f32 to vector<8x32xf32>
    %39 = vector.extract_strided_slice %33 {offsets = [0, 0], sizes = [8, 8], strides = [1, 1]} : vector<8x32xf32> to vector<8x8xf32>
    %40 = vector.extract_strided_slice %34 {offsets = [0, 0], sizes = [16, 8], strides = [1, 1]} : vector<16x32xf32> to vector<16x8xf32>
    %cst_37 = arith.constant dense<0.000000e+00> : vector<8x16xf32>
    %41 = tpu.matmul %39, %40, %cst_37 {dimension_numbers = #tpu.dot_dimension_numbers<[1], [1], [0], [0], [0, 0, 1, 0], [], []>} : vector<8x8xf32>, vector<16x8xf32>, vector<8x16xf32> -> vector<8x16xf32>
    %42 = vector.broadcast %36 : vector<1x16xf32> to vector<8x16xf32>
    %43 = arith.addf %41, %42 : vector<8x16xf32>
    %cst_38 = arith.constant dense<0xFF800000> : vector<8xf32>
    %44 = vector.multi_reduction <maximumf>, %43, %cst_38 [1] : vector<8x16xf32> to vector<8xf32>
    %45 = vector.shape_cast %44 : vector<8xf32> to vector<8x1xf32>
    %46 = vector.broadcast %45 : vector<8x1xf32> to vector<8x16xf32>
    %47 = arith.subf %43, %46 : vector<8x16xf32>
    %48 = math.exp %47 : vector<8x16xf32>
    %cst_39 = arith.constant dense<0.000000e+00> : vector<8xf32>
    %49 = vector.multi_reduction <add>, %48, %cst_39 [1] : vector<8x16xf32> to vector<8xf32>
    %50 = vector.shape_cast %49 : vector<8xf32> to vector<8x1xf32>
    %51 = tpu.reciprocal %50 {approx = true} : vector<8x1xf32> -> vector<8x1xf32>
    %52 = arith.mulf %50, %51 : vector<8x1xf32>
    %cst_40 = arith.constant 2.000000e+00 : f32
    %53 = vector.broadcast %cst_40 : f32 to vector<8x1xf32>
    %54 = arith.subf %53, %52 : vector<8x1xf32>
    %55 = arith.mulf %51, %54 : vector<8x1xf32>
    %56 = vector.broadcast %55 : vector<8x1xf32> to vector<8x16xf32>
    %57 = arith.mulf %48, %56 : vector<8x16xf32>
    %58 = arith.addf %37, %57 : vector<8x16xf32>
    %59 = vector.extract_strided_slice %35 {offsets = [0, 0], sizes = [16, 8], strides = [1, 1]} : vector<16x32xf32> to vector<16x8xf32>
    %cst_41 = arith.constant dense<0.000000e+00> : vector<8x8xf32>
    %60 = tpu.matmul %57, %59, %cst_41 {dimension_numbers = #tpu.dot_dimension_numbers<[1], [0], [0], [1], [0, 0, 1, 1], [], []>} : vector<8x16xf32>, vector<16x8xf32>, vector<8x8xf32> -> vector<8x8xf32>
    %61 = vector.extract_strided_slice %3 {offsets = [0, 0], sizes = [8, 32], strides = [1, 1]} : vector<32x32xf32> to vector<8x32xf32>
    %cst_42 = arith.constant dense<0.000000e+00> : vector<8x32xf32>
    %62 = tpu.matmul %60, %61, %cst_42 {dimension_numbers = #tpu.dot_dimension_numbers<[1], [0], [0], [1], [0, 0, 1, 1], [], []>} : vector<8x8xf32>, vector<8x32xf32>, vector<8x32xf32> -> vector<8x32xf32>
    %63 = arith.addf %38, %62 : vector<8x32xf32>
    %64 = vector.extract_strided_slice %33 {offsets = [0, 8], sizes = [8, 8], strides = [1, 1]} : vector<8x32xf32> to vector<8x8xf32>
    %65 = vector.extract_strided_slice %34 {offsets = [0, 8], sizes = [16, 8], strides = [1, 1]} : vector<16x32xf32> to vector<16x8xf32>
    %cst_43 = arith.constant dense<0.000000e+00> : vector<8x16xf32>
    %66 = tpu.matmul %64, %65, %cst_43 {dimension_numbers = #tpu.dot_dimension_numbers<[1], [1], [0], [0], [0, 0, 1, 0], [], []>} : vector<8x8xf32>, vector<16x8xf32>, vector<8x16xf32> -> vector<8x16xf32>
    %67 = vector.broadcast %36 : vector<1x16xf32> to vector<8x16xf32>
    %68 = arith.addf %66, %67 : vector<8x16xf32>
    %cst_44 = arith.constant dense<0xFF800000> : vector<8xf32>
    %69 = vector.multi_reduction <maximumf>, %68, %cst_44 [1] : vector<8x16xf32> to vector<8xf32>
    %70 = vector.shape_cast %69 : vector<8xf32> to vector<8x1xf32>
    %71 = vector.broadcast %70 : vector<8x1xf32> to vector<8x16xf32>
    %72 = arith.subf %68, %71 : vector<8x16xf32>
    %73 = math.exp %72 : vector<8x16xf32>
    %cst_45 = arith.constant dense<0.000000e+00> : vector<8xf32>
    %74 = vector.multi_reduction <add>, %73, %cst_45 [1] : vector<8x16xf32> to vector<8xf32>
    %75 = vector.shape_cast %74 : vector<8xf32> to vector<8x1xf32>
    %76 = tpu.reciprocal %75 {approx = true} : vector<8x1xf32> -> vector<8x1xf32>
    %77 = arith.mulf %75, %76 : vector<8x1xf32>
    %cst_46 = arith.constant 2.000000e+00 : f32
    %78 = vector.broadcast %cst_46 : f32 to vector<8x1xf32>
    %79 = arith.subf %78, %77 : vector<8x1xf32>
    %80 = arith.mulf %76, %79 : vector<8x1xf32>
    %81 = vector.broadcast %80 : vector<8x1xf32> to vector<8x16xf32>
    %82 = arith.mulf %73, %81 : vector<8x16xf32>
    %83 = arith.addf %58, %82 : vector<8x16xf32>
    %84 = vector.extract_strided_slice %35 {offsets = [0, 8], sizes = [16, 8], strides = [1, 1]} : vector<16x32xf32> to vector<16x8xf32>
    %cst_47 = arith.constant dense<0.000000e+00> : vector<8x8xf32>
    %85 = tpu.matmul %82, %84, %cst_47 {dimension_numbers = #tpu.dot_dimension_numbers<[1], [0], [0], [1], [0, 0, 1, 1], [], []>} : vector<8x16xf32>, vector<16x8xf32>, vector<8x8xf32> -> vector<8x8xf32>
    %86 = vector.extract_strided_slice %3 {offsets = [8, 0], sizes = [8, 32], strides = [1, 1]} : vector<32x32xf32> to vector<8x32xf32>
    %cst_48 = arith.constant dense<0.000000e+00> : vector<8x32xf32>
    %87 = tpu.matmul %85, %86, %cst_48 {dimension_numbers = #tpu.dot_dimension_numbers<[1], [0], [0], [1], [0, 0, 1, 1], [], []>} : vector<8x8xf32>, vector<8x32xf32>, vector<8x32xf32> -> vector<8x32xf32>
    %88 = arith.addf %63, %87 : vector<8x32xf32>
    %89 = vector.extract_strided_slice %33 {offsets = [0, 16], sizes = [8, 8], strides = [1, 1]} : vector<8x32xf32> to vector<8x8xf32>
    %90 = vector.extract_strided_slice %34 {offsets = [0, 16], sizes = [16, 8], strides = [1, 1]} : vector<16x32xf32> to vector<16x8xf32>
    %cst_49 = arith.constant dense<0.000000e+00> : vector<8x16xf32>
    %91 = tpu.matmul %89, %90, %cst_49 {dimension_numbers = #tpu.dot_dimension_numbers<[1], [1], [0], [0], [0, 0, 1, 0], [], []>} : vector<8x8xf32>, vector<16x8xf32>, vector<8x16xf32> -> vector<8x16xf32>
    %92 = vector.broadcast %36 : vector<1x16xf32> to vector<8x16xf32>
    %93 = arith.addf %91, %92 : vector<8x16xf32>
    %cst_50 = arith.constant dense<0xFF800000> : vector<8xf32>
    %94 = vector.multi_reduction <maximumf>, %93, %cst_50 [1] : vector<8x16xf32> to vector<8xf32>
    %95 = vector.shape_cast %94 : vector<8xf32> to vector<8x1xf32>
    %96 = vector.broadcast %95 : vector<8x1xf32> to vector<8x16xf32>
    %97 = arith.subf %93, %96 : vector<8x16xf32>
    %98 = math.exp %97 : vector<8x16xf32>
    %cst_51 = arith.constant dense<0.000000e+00> : vector<8xf32>
    %99 = vector.multi_reduction <add>, %98, %cst_51 [1] : vector<8x16xf32> to vector<8xf32>
    %100 = vector.shape_cast %99 : vector<8xf32> to vector<8x1xf32>
    %101 = tpu.reciprocal %100 {approx = true} : vector<8x1xf32> -> vector<8x1xf32>
    %102 = arith.mulf %100, %101 : vector<8x1xf32>
    %cst_52 = arith.constant 2.000000e+00 : f32
    %103 = vector.broadcast %cst_52 : f32 to vector<8x1xf32>
    %104 = arith.subf %103, %102 : vector<8x1xf32>
    %105 = arith.mulf %101, %104 : vector<8x1xf32>
    %106 = vector.broadcast %105 : vector<8x1xf32> to vector<8x16xf32>
    %107 = arith.mulf %98, %106 : vector<8x16xf32>
    %108 = arith.addf %83, %107 : vector<8x16xf32>
    %109 = vector.extract_strided_slice %35 {offsets = [0, 16], sizes = [16, 8], strides = [1, 1]} : vector<16x32xf32> to vector<16x8xf32>
    %cst_53 = arith.constant dense<0.000000e+00> : vector<8x8xf32>
    %110 = tpu.matmul %107, %109, %cst_53 {dimension_numbers = #tpu.dot_dimension_numbers<[1], [0], [0], [1], [0, 0, 1, 1], [], []>} : vector<8x16xf32>, vector<16x8xf32>, vector<8x8xf32> -> vector<8x8xf32>
    %111 = vector.extract_strided_slice %3 {offsets = [16, 0], sizes = [8, 32], strides = [1, 1]} : vector<32x32xf32> to vector<8x32xf32>
    %cst_54 = arith.constant dense<0.000000e+00> : vector<8x32xf32>
    %112 = tpu.matmul %110, %111, %cst_54 {dimension_numbers = #tpu.dot_dimension_numbers<[1], [0], [0], [1], [0, 0, 1, 1], [], []>} : vector<8x8xf32>, vector<8x32xf32>, vector<8x32xf32> -> vector<8x32xf32>
    %113 = arith.addf %88, %112 : vector<8x32xf32>
    %114 = vector.extract_strided_slice %33 {offsets = [0, 24], sizes = [8, 8], strides = [1, 1]} : vector<8x32xf32> to vector<8x8xf32>
    %115 = vector.extract_strided_slice %34 {offsets = [0, 24], sizes = [16, 8], strides = [1, 1]} : vector<16x32xf32> to vector<16x8xf32>
    %cst_55 = arith.constant dense<0.000000e+00> : vector<8x16xf32>
    %116 = tpu.matmul %114, %115, %cst_55 {dimension_numbers = #tpu.dot_dimension_numbers<[1], [1], [0], [0], [0, 0, 1, 0], [], []>} : vector<8x8xf32>, vector<16x8xf32>, vector<8x16xf32> -> vector<8x16xf32>
    %117 = vector.broadcast %36 : vector<1x16xf32> to vector<8x16xf32>
    %118 = arith.addf %116, %117 : vector<8x16xf32>
    %cst_56 = arith.constant dense<0xFF800000> : vector<8xf32>
    %119 = vector.multi_reduction <maximumf>, %118, %cst_56 [1] : vector<8x16xf32> to vector<8xf32>
    %120 = vector.shape_cast %119 : vector<8xf32> to vector<8x1xf32>
    %121 = vector.broadcast %120 : vector<8x1xf32> to vector<8x16xf32>
    %122 = arith.subf %118, %121 : vector<8x16xf32>
    %123 = math.exp %122 : vector<8x16xf32>
    %cst_57 = arith.constant dense<0.000000e+00> : vector<8xf32>
    %124 = vector.multi_reduction <add>, %123, %cst_57 [1] : vector<8x16xf32> to vector<8xf32>
    %125 = vector.shape_cast %124 : vector<8xf32> to vector<8x1xf32>
    %126 = tpu.reciprocal %125 {approx = true} : vector<8x1xf32> -> vector<8x1xf32>
    %127 = arith.mulf %125, %126 : vector<8x1xf32>
    %cst_58 = arith.constant 2.000000e+00 : f32
    %128 = vector.broadcast %cst_58 : f32 to vector<8x1xf32>
    %129 = arith.subf %128, %127 : vector<8x1xf32>
    %130 = arith.mulf %126, %129 : vector<8x1xf32>
    %131 = vector.broadcast %130 : vector<8x1xf32> to vector<8x16xf32>
    %132 = arith.mulf %123, %131 : vector<8x16xf32>
    %133 = arith.addf %108, %132 : vector<8x16xf32>
    %134 = vector.extract_strided_slice %35 {offsets = [0, 24], sizes = [16, 8], strides = [1, 1]} : vector<16x32xf32> to vector<16x8xf32>
    %cst_59 = arith.constant dense<0.000000e+00> : vector<8x8xf32>
    %135 = tpu.matmul %132, %134, %cst_59 {dimension_numbers = #tpu.dot_dimension_numbers<[1], [0], [0], [1], [0, 0, 1, 1], [], []>} : vector<8x16xf32>, vector<16x8xf32>, vector<8x8xf32> -> vector<8x8xf32>
    %136 = vector.extract_strided_slice %3 {offsets = [24, 0], sizes = [8, 32], strides = [1, 1]} : vector<32x32xf32> to vector<8x32xf32>
    %cst_60 = arith.constant dense<0.000000e+00> : vector<8x32xf32>
    %137 = tpu.matmul %135, %136, %cst_60 {dimension_numbers = #tpu.dot_dimension_numbers<[1], [0], [0], [1], [0, 0, 1, 1], [], []>} : vector<8x8xf32>, vector<8x32xf32>, vector<8x32xf32> -> vector<8x32xf32>
    %138 = arith.addf %113, %137 : vector<8x32xf32>
    %cst_61 = arith.constant 2.500000e-01 : f32
    %139 = vector.broadcast %cst_61 : f32 to vector<8x16xf32>
    %140 = arith.mulf %133, %139 : vector<8x16xf32>
    %c0_62 = arith.constant 0 : index
    %c0_63 = arith.constant 0 : index
    %c0_64 = arith.constant 0 : index
    %141 = vector.load %arg10[%c0_62, %c0_63, %c0_64] : memref<2x8x16xf32, #tpu.memory_space<vmem>>, vector<1x8x16xf32>
    %142 = vector.shape_cast %141 : vector<1x8x16xf32> to vector<8x16xf32>
    %143 = vector.shape_cast %140 : vector<8x16xf32> to vector<1x8x16xf32>
    tpu.vector_store %arg10[%c0_62, %c0_63, %c0_64], %143 {strides = array<i32>} : memref<2x8x16xf32, #tpu.memory_space<vmem>>, vector<1x8x16xf32>,
    %144 = vector.extract_strided_slice %32 {offsets = [8, 0], sizes = [8, 32], strides = [1, 1]} : vector<16x32xf32> to vector<8x32xf32>
    %145 = vector.extract_strided_slice %27 {offsets = [16, 0], sizes = [16, 32], strides = [1, 1]} : vector<32x32xf32> to vector<16x32xf32>
    %146 = vector.extract_strided_slice %30 {offsets = [16, 0], sizes = [16, 32], strides = [1, 1]} : vector<32x32xf32> to vector<16x32xf32>
    %c1 = arith.constant 1 : index
    %c0_65 = arith.constant 0 : index
    %147 = vector.load %arg5[%c1, %c0_65] : memref<2x16xf32, #tpu.memory_space<vmem>>, vector<1x16xf32>
    %cst_66 = arith.constant 0.000000e+00 : f32
    %148 = vector.broadcast %cst_66 : f32 to vector<8x16xf32>
    %cst_67 = arith.constant 0.000000e+00 : f32
    %149 = vector.broadcast %cst_67 : f32 to vector<8x32xf32>
    %150 = vector.extract_strided_slice %144 {offsets = [0, 0], sizes = [8, 8], strides = [1, 1]} : vector<8x32xf32> to vector<8x8xf32>
    %151 = vector.extract_strided_slice %145 {offsets = [0, 0], sizes = [16, 8], strides = [1, 1]} : vector<16x32xf32> to vector<16x8xf32>
    %cst_68 = arith.constant dense<0.000000e+00> : vector<8x16xf32>
    %152 = tpu.matmul %150, %151, %cst_68 {dimension_numbers = #tpu.dot_dimension_numbers<[1], [1], [0], [0], [0, 0, 1, 0], [], []>} : vector<8x8xf32>, vector<16x8xf32>, vector<8x16xf32> -> vector<8x16xf32>
    %153 = vector.broadcast %147 : vector<1x16xf32> to vector<8x16xf32>
    %154 = arith.addf %152, %153 : vector<8x16xf32>
    %cst_69 = arith.constant dense<0xFF800000> : vector<8xf32>
    %155 = vector.multi_reduction <maximumf>, %154, %cst_69 [1] : vector<8x16xf32> to vector<8xf32>
    %156 = vector.shape_cast %155 : vector<8xf32> to vector<8x1xf32>
    %157 = vector.broadcast %156 : vector<8x1xf32> to vector<8x16xf32>
    %158 = arith.subf %154, %157 : vector<8x16xf32>
    %159 = math.exp %158 : vector<8x16xf32>
    %cst_70 = arith.constant dense<0.000000e+00> : vector<8xf32>
    %160 = vector.multi_reduction <add>, %159, %cst_70 [1] : vector<8x16xf32> to vector<8xf32>
    %161 = vector.shape_cast %160 : vector<8xf32> to vector<8x1xf32>
    %162 = tpu.reciprocal %161 {approx = true} : vector<8x1xf32> -> vector<8x1xf32>
    %163 = arith.mulf %161, %162 : vector<8x1xf32>
    %cst_71 = arith.constant 2.000000e+00 : f32
    %164 = vector.broadcast %cst_71 : f32 to vector<8x1xf32>
    %165 = arith.subf %164, %163 : vector<8x1xf32>
    %166 = arith.mulf %162, %165 : vector<8x1xf32>
    %167 = vector.broadcast %166 : vector<8x1xf32> to vector<8x16xf32>
    %168 = arith.mulf %159, %167 : vector<8x16xf32>
    %169 = arith.addf %148, %168 : vector<8x16xf32>
    %170 = vector.extract_strided_slice %146 {offsets = [0, 0], sizes = [16, 8], strides = [1, 1]} : vector<16x32xf32> to vector<16x8xf32>
    %cst_72 = arith.constant dense<0.000000e+00> : vector<8x8xf32>
    %171 = tpu.matmul %168, %170, %cst_72 {dimension_numbers = #tpu.dot_dimension_numbers<[1], [0], [0], [1], [0, 0, 1, 1], [], []>} : vector<8x16xf32>, vector<16x8xf32>, vector<8x8xf32> -> vector<8x8xf32>
    %172 = vector.extract_strided_slice %3 {offsets = [0, 0], sizes = [8, 32], strides = [1, 1]} : vector<32x32xf32> to vector<8x32xf32>
    %cst_73 = arith.constant dense<0.000000e+00> : vector<8x32xf32>
    %173 = tpu.matmul %171, %172, %cst_73 {dimension_numbers = #tpu.dot_dimension_numbers<[1], [0], [0], [1], [0, 0, 1, 1], [], []>} : vector<8x8xf32>, vector<8x32xf32>, vector<8x32xf32> -> vector<8x32xf32>
    %174 = arith.addf %149, %173 : vector<8x32xf32>
    %175 = vector.extract_strided_slice %144 {offsets = [0, 8], sizes = [8, 8], strides = [1, 1]} : vector<8x32xf32> to vector<8x8xf32>
    %176 = vector.extract_strided_slice %145 {offsets = [0, 8], sizes = [16, 8], strides = [1, 1]} : vector<16x32xf32> to vector<16x8xf32>
    %cst_74 = arith.constant dense<0.000000e+00> : vector<8x16xf32>
    %177 = tpu.matmul %175, %176, %cst_74 {dimension_numbers = #tpu.dot_dimension_numbers<[1], [1], [0], [0], [0, 0, 1, 0], [], []>} : vector<8x8xf32>, vector<16x8xf32>, vector<8x16xf32> -> vector<8x16xf32>
    %178 = vector.broadcast %147 : vector<1x16xf32> to vector<8x16xf32>
    %179 = arith.addf %177, %178 : vector<8x16xf32>
    %cst_75 = arith.constant dense<0xFF800000> : vector<8xf32>
    %180 = vector.multi_reduction <maximumf>, %179, %cst_75 [1] : vector<8x16xf32> to vector<8xf32>
    %181 = vector.shape_cast %180 : vector<8xf32> to vector<8x1xf32>
    %182 = vector.broadcast %181 : vector<8x1xf32> to vector<8x16xf32>
    %183 = arith.subf %179, %182 : vector<8x16xf32>
    %184 = math.exp %183 : vector<8x16xf32>
    %cst_76 = arith.constant dense<0.000000e+00> : vector<8xf32>
    %185 = vector.multi_reduction <add>, %184, %cst_76 [1] : vector<8x16xf32> to vector<8xf32>
    %186 = vector.shape_cast %185 : vector<8xf32> to vector<8x1xf32>
    %187 = tpu.reciprocal %186 {approx = true} : vector<8x1xf32> -> vector<8x1xf32>
    %188 = arith.mulf %186, %187 : vector<8x1xf32>
    %cst_77 = arith.constant 2.000000e+00 : f32
    %189 = vector.broadcast %cst_77 : f32 to vector<8x1xf32>
    %190 = arith.subf %189, %188 : vector<8x1xf32>
    %191 = arith.mulf %187, %190 : vector<8x1xf32>
    %192 = vector.broadcast %191 : vector<8x1xf32> to vector<8x16xf32>
    %193 = arith.mulf %184, %192 : vector<8x16xf32>
    %194 = arith.addf %169, %193 : vector<8x16xf32>
    %195 = vector.extract_strided_slice %146 {offsets = [0, 8], sizes = [16, 8], strides = [1, 1]} : vector<16x32xf32> to vector<16x8xf32>
    %cst_78 = arith.constant dense<0.000000e+00> : vector<8x8xf32>
    %196 = tpu.matmul %193, %195, %cst_78 {dimension_numbers = #tpu.dot_dimension_numbers<[1], [0], [0], [1], [0, 0, 1, 1], [], []>} : vector<8x16xf32>, vector<16x8xf32>, vector<8x8xf32> -> vector<8x8xf32>
    %197 = vector.extract_strided_slice %3 {offsets = [8, 0], sizes = [8, 32], strides = [1, 1]} : vector<32x32xf32> to vector<8x32xf32>
    %cst_79 = arith.constant dense<0.000000e+00> : vector<8x32xf32>
    %198 = tpu.matmul %196, %197, %cst_79 {dimension_numbers = #tpu.dot_dimension_numbers<[1], [0], [0], [1], [0, 0, 1, 1], [], []>} : vector<8x8xf32>, vector<8x32xf32>, vector<8x32xf32> -> vector<8x32xf32>
    %199 = arith.addf %174, %198 : vector<8x32xf32>
    %200 = vector.extract_strided_slice %144 {offsets = [0, 16], sizes = [8, 8], strides = [1, 1]} : vector<8x32xf32> to vector<8x8xf32>
    %201 = vector.extract_strided_slice %145 {offsets = [0, 16], sizes = [16, 8], strides = [1, 1]} : vector<16x32xf32> to vector<16x8xf32>
    %cst_80 = arith.constant dense<0.000000e+00> : vector<8x16xf32>
    %202 = tpu.matmul %200, %201, %cst_80 {dimension_numbers = #tpu.dot_dimension_numbers<[1], [1], [0], [0], [0, 0, 1, 0], [], []>} : vector<8x8xf32>, vector<16x8xf32>, vector<8x16xf32> -> vector<8x16xf32>
    %203 = vector.broadcast %147 : vector<1x16xf32> to vector<8x16xf32>
    %204 = arith.addf %202, %203 : vector<8x16xf32>
    %cst_81 = arith.constant dense<0xFF800000> : vector<8xf32>
    %205 = vector.multi_reduction <maximumf>, %204, %cst_81 [1] : vector<8x16xf32> to vector<8xf32>
    %206 = vector.shape_cast %205 : vector<8xf32> to vector<8x1xf32>
    %207 = vector.broadcast %206 : vector<8x1xf32> to vector<8x16xf32>
    %208 = arith.subf %204, %207 : vector<8x16xf32>
    %209 = math.exp %208 : vector<8x16xf32>
    %cst_82 = arith.constant dense<0.000000e+00> : vector<8xf32>
    %210 = vector.multi_reduction <add>, %209, %cst_82 [1] : vector<8x16xf32> to vector<8xf32>
    %211 = vector.shape_cast %210 : vector<8xf32> to vector<8x1xf32>
    %212 = tpu.reciprocal %211 {approx = true} : vector<8x1xf32> -> vector<8x1xf32>
    %213 = arith.mulf %211, %212 : vector<8x1xf32>
    %cst_83 = arith.constant 2.000000e+00 : f32
    %214 = vector.broadcast %cst_83 : f32 to vector<8x1xf32>
    %215 = arith.subf %214, %213 : vector<8x1xf32>
    %216 = arith.mulf %212, %215 : vector<8x1xf32>
    %217 = vector.broadcast %216 : vector<8x1xf32> to vector<8x16xf32>
    %218 = arith.mulf %209, %217 : vector<8x16xf32>
    %219 = arith.addf %194, %218 : vector<8x16xf32>
    %220 = vector.extract_strided_slice %146 {offsets = [0, 16], sizes = [16, 8], strides = [1, 1]} : vector<16x32xf32> to vector<16x8xf32>
    %cst_84 = arith.constant dense<0.000000e+00> : vector<8x8xf32>
    %221 = tpu.matmul %218, %220, %cst_84 {dimension_numbers = #tpu.dot_dimension_numbers<[1], [0], [0], [1], [0, 0, 1, 1], [], []>} : vector<8x16xf32>, vector<16x8xf32>, vector<8x8xf32> -> vector<8x8xf32>
    %222 = vector.extract_strided_slice %3 {offsets = [16, 0], sizes = [8, 32], strides = [1, 1]} : vector<32x32xf32> to vector<8x32xf32>
    %cst_85 = arith.constant dense<0.000000e+00> : vector<8x32xf32>
    %223 = tpu.matmul %221, %222, %cst_85 {dimension_numbers = #tpu.dot_dimension_numbers<[1], [0], [0], [1], [0, 0, 1, 1], [], []>} : vector<8x8xf32>, vector<8x32xf32>, vector<8x32xf32> -> vector<8x32xf32>
    %224 = arith.addf %199, %223 : vector<8x32xf32>
    %225 = vector.extract_strided_slice %144 {offsets = [0, 24], sizes = [8, 8], strides = [1, 1]} : vector<8x32xf32> to vector<8x8xf32>
    %226 = vector.extract_strided_slice %145 {offsets = [0, 24], sizes = [16, 8], strides = [1, 1]} : vector<16x32xf32> to vector<16x8xf32>
    %cst_86 = arith.constant dense<0.000000e+00> : vector<8x16xf32>
    %227 = tpu.matmul %225, %226, %cst_86 {dimension_numbers = #tpu.dot_dimension_numbers<[1], [1], [0], [0], [0, 0, 1, 0], [], []>} : vector<8x8xf32>, vector<16x8xf32>, vector<8x16xf32> -> vector<8x16xf32>
    %228 = vector.broadcast %147 : vector<1x16xf32> to vector<8x16xf32>
    %229 = arith.addf %227, %228 : vector<8x16xf32>
    %cst_87 = arith.constant dense<0xFF800000> : vector<8xf32>
    %230 = vector.multi_reduction <maximumf>, %229, %cst_87 [1] : vector<8x16xf32> to vector<8xf32>
    %231 = vector.shape_cast %230 : vector<8xf32> to vector<8x1xf32>
    %232 = vector.broadcast %231 : vector<8x1xf32> to vector<8x16xf32>
    %233 = arith.subf %229, %232 : vector<8x16xf32>
    %234 = math.exp %233 : vector<8x16xf32>
    %cst_88 = arith.constant dense<0.000000e+00> : vector<8xf32>
    %235 = vector.multi_reduction <add>, %234, %cst_88 [1] : vector<8x16xf32> to vector<8xf32>
    %236 = vector.shape_cast %235 : vector<8xf32> to vector<8x1xf32>
    %237 = tpu.reciprocal %236 {approx = true} : vector<8x1xf32> -> vector<8x1xf32>
    %238 = arith.mulf %236, %237 : vector<8x1xf32>
    %cst_89 = arith.constant 2.000000e+00 : f32
    %239 = vector.broadcast %cst_89 : f32 to vector<8x1xf32>
    %240 = arith.subf %239, %238 : vector<8x1xf32>
    %241 = arith.mulf %237, %240 : vector<8x1xf32>
    %242 = vector.broadcast %241 : vector<8x1xf32> to vector<8x16xf32>
    %243 = arith.mulf %234, %242 : vector<8x16xf32>
    %244 = arith.addf %219, %243 : vector<8x16xf32>
    %245 = vector.extract_strided_slice %146 {offsets = [0, 24], sizes = [16, 8], strides = [1, 1]} : vector<16x32xf32> to vector<16x8xf32>
    %cst_90 = arith.constant dense<0.000000e+00> : vector<8x8xf32>
    %246 = tpu.matmul %243, %245, %cst_90 {dimension_numbers = #tpu.dot_dimension_numbers<[1], [0], [0], [1], [0, 0, 1, 1], [], []>} : vector<8x16xf32>, vector<16x8xf32>, vector<8x8xf32> -> vector<8x8xf32>
    %247 = vector.extract_strided_slice %3 {offsets = [24, 0], sizes = [8, 32], strides = [1, 1]} : vector<32x32xf32> to vector<8x32xf32>
    %cst_91 = arith.constant dense<0.000000e+00> : vector<8x32xf32>
    %248 = tpu.matmul %246, %247, %cst_91 {dimension_numbers = #tpu.dot_dimension_numbers<[1], [0], [0], [1], [0, 0, 1, 1], [], []>} : vector<8x8xf32>, vector<8x32xf32>, vector<8x32xf32> -> vector<8x32xf32>
    %249 = arith.addf %224, %248 : vector<8x32xf32>
    %cst_92 = arith.constant 2.500000e-01 : f32
    %250 = vector.broadcast %cst_92 : f32 to vector<8x16xf32>
    %251 = arith.mulf %244, %250 : vector<8x16xf32>
    %c1_93 = arith.constant 1 : index
    %c0_94 = arith.constant 0 : index
    %c0_95 = arith.constant 0 : index
    %252 = vector.load %arg10[%c1_93, %c0_94, %c0_95] : memref<2x8x16xf32, #tpu.memory_space<vmem>>, vector<1x8x16xf32>
    %253 = vector.shape_cast %252 : vector<1x8x16xf32> to vector<8x16xf32>
    %254 = vector.shape_cast %251 : vector<8x16xf32> to vector<1x8x16xf32>
    tpu.vector_store %arg10[%c1_93, %c0_94, %c0_95], %254 {strides = array<i32>} : memref<2x8x16xf32, #tpu.memory_space<vmem>>, vector<1x8x16xf32>,
    %255 = tpu.concatenate %138, %249 in 0 : vector<8x32xf32>, vector<8x32xf32> -> vector<16x32xf32>
    %256 = vector.broadcast %9 : vector<1x32xf32> to vector<16x32xf32>
    %257 = arith.addf %255, %256 : vector<16x32xf32>
    %258 = arith.addf %16, %257 : vector<16x32xf32>
    %cst_96 = arith.constant dense<0.000000e+00> : vector<16xf32>
    %259 = vector.multi_reduction <add>, %258, %cst_96 [1] : vector<16x32xf32> to vector<16xf32>
    %260 = vector.shape_cast %259 : vector<16xf32> to vector<16x1xf32>
    %cst_97 = arith.constant 3.200000e+01 : f32
    %261 = vector.broadcast %cst_97 : f32 to vector<16x1xf32>
    %262 = arith.divf %260, %261 : vector<16x1xf32>
    %263 = vector.broadcast %262 : vector<16x1xf32> to vector<16x32xf32>
    %264 = arith.subf %258, %263 : vector<16x32xf32>
    %265 = arith.mulf %264, %264 : vector<16x32xf32>
    %cst_98 = arith.constant dense<0.000000e+00> : vector<16xf32>
    %266 = vector.multi_reduction <add>, %265, %cst_98 [1] : vector<16x32xf32> to vector<16xf32>
    %267 = vector.shape_cast %266 : vector<16xf32> to vector<16x1xf32>
    %cst_99 = arith.constant 3.200000e+01 : f32
    %268 = vector.broadcast %cst_99 : f32 to vector<16x1xf32>
    %269 = arith.divf %267, %268 : vector<16x1xf32>
    %270 = vector.broadcast %262 : vector<16x1xf32> to vector<16x32xf32>
    %271 = arith.subf %258, %270 : vector<16x32xf32>
    %cst_100 = arith.constant 9.99999974E-6 : f32
    %272 = vector.broadcast %cst_100 : f32 to vector<16x1xf32>
    %273 = arith.addf %269, %272 : vector<16x1xf32>
    %274 = math.rsqrt %273 : vector<16x1xf32>
    %275 = vector.broadcast %274 : vector<16x1xf32> to vector<16x32xf32>
    %276 = arith.mulf %271, %275 : vector<16x32xf32>
    %277 = vector.broadcast %10 : vector<1x32xf32> to vector<16x32xf32>
    %278 = arith.mulf %276, %277 : vector<16x32xf32>
    %279 = vector.broadcast %11 : vector<1x32xf32> to vector<16x32xf32>
    %280 = arith.addf %278, %279 : vector<16x32xf32>
    %cst_101 = arith.constant dense<0.000000e+00> : vector<16x64xf32>
    %281 = tpu.matmul %280, %4, %cst_101 {dimension_numbers = #tpu.dot_dimension_numbers<[1], [0], [0], [1], [0, 0, 1, 1], [], []>} : vector<16x32xf32>, vector<32x64xf32>, vector<16x64xf32> -> vector<16x64xf32>
    %282 = vector.broadcast %12 : vector<1x64xf32> to vector<16x64xf32>
    %283 = arith.addf %281, %282 : vector<16x64xf32>
    %cst_102 = arith.constant 0.000000e+00 : f32
    %284 = vector.broadcast %cst_102 : f32 to vector<16x64xf32>
    %285 = arith.maximumf %283, %284 : vector<16x64xf32>
    %cst_103 = arith.constant dense<0.000000e+00> : vector<16x32xf32>
    %286 = tpu.matmul %285, %5, %cst_103 {dimension_numbers = #tpu.dot_dimension_numbers<[1], [0], [0], [1], [0, 0, 1, 1], [], []>} : vector<16x64xf32>, vector<64x32xf32>, vector<16x32xf32> -> vector<16x32xf32>
    %287 = vector.broadcast %13 : vector<1x32xf32> to vector<16x32xf32>
    %288 = arith.addf %286, %287 : vector<16x32xf32>
    %289 = arith.addf %280, %288 : vector<16x32xf32>
    %cst_104 = arith.constant dense<0.000000e+00> : vector<16xf32>
    %290 = vector.multi_reduction <add>, %289, %cst_104 [1] : vector<16x32xf32> to vector<16xf32>
    %291 = vector.shape_cast %290 : vector<16xf32> to vector<16x1xf32>
    %cst_105 = arith.constant 3.200000e+01 : f32
    %292 = vector.broadcast %cst_105 : f32 to vector<16x1xf32>
    %293 = arith.divf %291, %292 : vector<16x1xf32>
    %294 = vector.broadcast %293 : vector<16x1xf32> to vector<16x32xf32>
    %295 = arith.subf %289, %294 : vector<16x32xf32>
    %296 = arith.mulf %295, %295 : vector<16x32xf32>
    %cst_106 = arith.constant dense<0.000000e+00> : vector<16xf32>
    %297 = vector.multi_reduction <add>, %296, %cst_106 [1] : vector<16x32xf32> to vector<16xf32>
    %298 = vector.shape_cast %297 : vector<16xf32> to vector<16x1xf32>
    %cst_107 = arith.constant 3.200000e+01 : f32
    %299 = vector.broadcast %cst_107 : f32 to vector<16x1xf32>
    %300 = arith.divf %298, %299 : vector<16x1xf32>
    %301 = vector.broadcast %293 : vector<16x1xf32> to vector<16x32xf32>
    %302 = arith.subf %289, %301 : vector<16x32xf32>
    %cst_108 = arith.constant 9.99999974E-6 : f32
    %303 = vector.broadcast %cst_108 : f32 to vector<16x1xf32>
    %304 = arith.addf %300, %303 : vector<16x1xf32>
    %305 = math.rsqrt %304 : vector<16x1xf32>
    %306 = vector.broadcast %305 : vector<16x1xf32> to vector<16x32xf32>
    %307 = arith.mulf %302, %306 : vector<16x32xf32>
    %308 = vector.broadcast %14 : vector<1x32xf32> to vector<16x32xf32>
    %309 = arith.mulf %307, %308 : vector<16x32xf32>
    %310 = vector.broadcast %15 : vector<1x32xf32> to vector<16x32xf32>
    %311 = arith.addf %309, %310 : vector<16x32xf32>
    %c0_109 = arith.constant 0 : index
    %c0_110 = arith.constant 0 : index
    %312 = vector.load %arg9[%c0_109, %c0_110] : memref<16x32xf32, #tpu.memory_space<vmem>>, vector<16x32xf32>
    tpu.vector_store %arg9[%c0_109, %c0_110], %311 {strides = array<i32>} : memref<16x32xf32, #tpu.memory_space<vmem>>, vector<16x32xf32>,
    return
  }
  func.func @transform_0(%arg0: i32) -> (i32, i32) {
    %c0_i32 = arith.constant 0 : i32
    %c0_i32_0 = arith.constant 0 : i32
    %c0_i32_1 = arith.constant 0 : i32
    return %c0_i32, %c0_i32_0 : i32, i32
  }
  func.func @transform_1(%arg0: i32) -> (i32, i32) {
    %c0_i32 = arith.constant 0 : i32
    %c0_i32_0 = arith.constant 0 : i32
    %c0_i32_1 = arith.constant 0 : i32
    return %c0_i32, %c0_i32_0 : i32, i32
  }
  func.func @transform_2(%arg0: i32) -> (i32, i32) {
    %c0_i32 = arith.constant 0 : i32
    %c0_i32_0 = arith.constant 0 : i32
    %c0_i32_1 = arith.constant 0 : i32
    return %c0_i32, %c0_i32_0 : i32, i32
  }
  func.func @transform_3(%arg0: i32) -> (i32, i32) {
    %c0_i32 = arith.constant 0 : i32
    %c0_i32_0 = arith.constant 0 : i32
    %c0_i32_1 = arith.constant 0 : i32
    return %c0_i32, %c0_i32_0 : i32, i32
  }
  func.func @transform_4(%arg0: i32) -> (i32, i32) {
    %c0_i32 = arith.constant 0 : i32
    %c0_i32_0 = arith.constant 0 : i32
    %c0_i32_1 = arith.constant 0 : i32
    return %c0_i32, %c0_i32_0 : i32, i32
  }
  func.func @transform_5(%arg0: i32) -> (i32, i32) {
    %c0_i32 = arith.constant 0 : i32
    %c0_i32_0 = arith.constant 0 : i32
    %c0_i32_1 = arith.constant 0 : i32
    return %c0_i32, %c0_i32_0 : i32, i32
  }
  func.func @transform_6(%arg0: i32) -> (i32, i32) {
    %c0_i32 = arith.constant 0 : i32
    %c0_i32_0 = arith.constant 0 : i32
    %c0_i32_1 = arith.constant 0 : i32
    return %c0_i32, %c0_i32_0 : i32, i32
  }
  func.func @transform_7(%arg0: i32) -> (i32, i32) {
    %c0_i32 = arith.constant 0 : i32
    %c0_i32_0 = arith.constant 0 : i32
    %c0_i32_1 = arith.constant 0 : i32
    return %c0_i32, %c0_i32_0 : i32, i32
  }
  func.func @transform_8(%arg0: i32) -> (i32, i32) {
    %c0_i32 = arith.constant 0 : i32
    %c0_i32_0 = arith.constant 0 : i32
    %c0_i32_1 = arith.constant 0 : i32
    return %c0_i32, %c0_i32_0 : i32, i32
  }
  func.func @transform_9(%arg0: i32) -> (i32, i32, i32) {
    %c0_i32 = arith.constant 0 : i32
    %c0_i32_0 = arith.constant 0 : i32
    %c0_i32_1 = arith.constant 0 : i32
    %c0_i32_2 = arith.constant 0 : i32
    return %c0_i32, %c0_i32_0, %c0_i32_1 : i32, i32, i32
  }
}

</mosaic_0001>

<llo_original>
// kernel: tpu_custom_call.1
$region0: #{tpu_custom_call.1}
  #allocation0 [shape = 'u32[]', space=smem, size = 0x4, offset = 0x4, fixed_abs, tag = 'smem constant byte address 0x4 - core index']
  #allocation1 [shape = 'u32[72,128]{1,0:T(1,128)}', space=vmem, size = 0x9000, scoped, tag = 'internal scratch']
  %s0 = inlined_call_operand.hbm [shape: f32[16,32], index: 0, kind: input, shape index: {}]
  %s1 = inlined_call_operand.vmem [shape: f32[32,32], index: 1, kind: input, shape index: {}]
  %s2 = inlined_call_operand.hbm [shape: f32[16,32], index: 2, kind: input, shape index: {}]
  %s3 = inlined_call_operand.hbm [shape: f32[32,32], index: 3, kind: input, shape index: {}]
  %s4 = inlined_call_operand.hbm [shape: f32[2,16], index: 4, kind: input, shape index: {}]
  %s5 = inlined_call_operand.vmem [shape: f32[32,192], index: 5, kind: input, shape index: {}]
  %s6 = inlined_call_operand.vmem [shape: f32[64,32], index: 6, kind: input, shape index: {}]
  %s7 = inlined_call_operand.vmem [shape: f32[1,352], index: 7, kind: input, shape index: {}]
  %s8 = inlined_call_operand.hbm [shape: f32[16,32], index: 8, kind: output, shape index: {0}]
  %s9 = inlined_call_operand.hbm [shape: f32[2,8,16], index: 9, kind: output, shape index: {1}]
  %10 = xla_tuple %s8, %s9
  %s11 = sld [smem:[#allocation0]]
  $region66: #{tpu_custom_call.1} parent=0
    _
  %s13 = ssub.s32 1, %s11
  %s14 = scalar_select 0, %s13, %s11
  $region1: #{tpu_custom_call.1} parent=0
    #allocation2 [shape = 'u8[8192]{0}', space=vmem, size = 0x2000, scoped, tag = 'input window, operand 0, single buffered']
    #allocation3 [shape = 's32[1]{0}', space=sflag, size = 0x4, scoped, tag = 'scoped memory for tpu_custom_call.1']
    #allocation4 [shape = 's32[1]{0}', space=sflag, size = 0x4, scoped, tag = 'scoped memory for tpu_custom_call.1']
    #allocation5 [shape = 'u8[8192]{0}', space=vmem, size = 0x2000, scoped, tag = 'input window, operand 2, single buffered']
    #allocation6 [shape = 's32[1]{0}', space=sflag, size = 0x4, scoped, tag = 'scoped memory for tpu_custom_call.1']
    #allocation7 [shape = 'u8[16384]{0}', space=vmem, size = 0x4000, scoped, tag = 'input window, operand 3, single buffered']
    #allocation8 [shape = 'u8[1024]{0}', space=vmem, size = 0x400, scoped, tag = 'input window, operand 4, single buffered']
    #allocation9 [shape = 's32[1]{0}', space=sflag, size = 0x4, scoped, tag = 'scoped memory for tpu_custom_call.1']
    #allocation10 [shape = 'u8[8192]{0}', space=vmem, size = 0x2000, scoped, tag = 'output window, operand 0, single buffered']
    #allocation11 [shape = 'u8[8192]{0}', space=vmem, size = 0x2000, scoped, tag = 'output window, operand 1, single buffered']
    #allocation12 [shape = 's32[1]{0}', space=sflag, size = 0x4, scoped, tag = 'scoped memory for tpu_custom_call.1']
    %15 = vsyncpa [#allocation3], 0
    %16 = vsyncpa [#allocation6], 0
    %17 = vsyncpa [#allocation9], 0
    %18 = vsyncpa [#allocation4], 0
    %19 = vsyncpa [#allocation12], 0
    // Predicated region
    $region2: #{tpu_custom_call.1} parent=1 // pred_check
      _
    $region3: #{tpu_custom_call.1} parent=1 // pred_check_branch
      %21 = sbr.rel (0) target = $region5
    $region4: #{tpu_custom_call.1} parent=1 // pred_region
      %23 = vsyncadd [#allocation3], 0
      %s24 = sshll.u32 %s0, 4
      %s25 = int_to_ptr.hbm [resolvable:$true] %s24
      %s26 = sshll.u32 [#allocation2], 4
      %s27 = int_to_ptr.vmem [resolvable:$true] %s26
      %32 = dma.hbm_to_vmem [thread:$0]  %s25, 256, %s27, [#allocation3], 128, 128, 8
    $region5: #{tpu_custom_call.1} parent=1 // pred_fallthru
      _
    // Predicated region
    $region6: #{tpu_custom_call.1} parent=1 // pred_check
      _
    $region7: #{tpu_custom_call.1} parent=1 // pred_check_branch
      %34 = sbr.rel (0) target = $region9
    $region8: #{tpu_custom_call.1} parent=1 // pred_region
      _
    $region9: #{tpu_custom_call.1} parent=1 // pred_fallthru
      _
    // Predicated region
    $region10: #{tpu_custom_call.1} parent=1 // pred_check
      _
    $region11: #{tpu_custom_call.1} parent=1 // pred_check_branch
      %36 = sbr.rel (0) target = $region13
    $region12: #{tpu_custom_call.1} parent=1 // pred_region
      %38 = vsyncadd [#allocation6], 0
      %s39 = sshll.u32 %s2, 4
      %s40 = int_to_ptr.hbm [resolvable:$true] %s39
      %s41 = sshll.u32 [#allocation5], 4
      %s42 = int_to_ptr.vmem [resolvable:$true] %s41
      %47 = dma.hbm_to_vmem [thread:$0]  %s40, 256, %s42, [#allocation6], 128, 128, 8
    $region13: #{tpu_custom_call.1} parent=1 // pred_fallthru
      _
    // Predicated region
    $region14: #{tpu_custom_call.1} parent=1 // pred_check
      _
    $region15: #{tpu_custom_call.1} parent=1 // pred_check_branch
      %49 = sbr.rel (0) target = $region17
    $region16: #{tpu_custom_call.1} parent=1 // pred_region
      %51 = vsyncadd [#allocation6], 0
      %s52 = sshll.u32 %s3, 4
      %s53 = int_to_ptr.hbm [resolvable:$true] %s52
      %s54 = sshll.u32 [#allocation7], 4
      %s55 = int_to_ptr.vmem [resolvable:$true] %s54
      %60 = dma.hbm_to_vmem [thread:$0]  %s53, 512, %s55, [#allocation6], 128, 128, 8
    $region17: #{tpu_custom_call.1} parent=1 // pred_fallthru
      _
    // Predicated region
    $region18: #{tpu_custom_call.1} parent=1 // pred_check
      _
    $region19: #{tpu_custom_call.1} parent=1 // pred_check_branch
      %62 = sbr.rel (0) target = $region21
    $region20: #{tpu_custom_call.1} parent=1 // pred_region
      %64 = vsyncadd [#allocation9], 0
      %s66 = sshll.u32 %s4, 4
      %s67 = int_to_ptr.hbm [resolvable:$true] %s66
      %s68 = sshll.u32 [#allocation8], 4
      %s69 = int_to_ptr.vmem [resolvable:$true] %s68
      %71 = dma.hbm_to_vmem [thread:$0]  %s67, 32, %s69, [#allocation9]
    $region21: #{tpu_custom_call.1} parent=1 // pred_fallthru
      _
    // Predicated region
    $region22: #{tpu_custom_call.1} parent=1 // pred_check
      _
    $region23: #{tpu_custom_call.1} parent=1 // pred_check_branch
      %73 = sbr.rel (0) target = $region25
    $region24: #{tpu_custom_call.1} parent=1 // pred_region
      _
    $region25: #{tpu_custom_call.1} parent=1 // pred_fallthru
      _
    // Predicated region
    $region26: #{tpu_custom_call.1} parent=1 // pred_check
      _
    $region27: #{tpu_custom_call.1} parent=1 // pred_check_branch
      %75 = sbr.rel (0) target = $region29
    $region28: #{tpu_custom_call.1} parent=1 // pred_region
      _
    $region29: #{tpu_custom_call.1} parent=1 // pred_fallthru
      _
    // Predicated region
    $region30: #{tpu_custom_call.1} parent=1 // pred_check
      _
    $region31: #{tpu_custom_call.1} parent=1 // pred_check_branch
      %77 = sbr.rel (0) target = $region33
    $region32: #{tpu_custom_call.1} parent=1 // pred_region
      _
    $region33: #{tpu_custom_call.1} parent=1 // pred_fallthru
      _
    // Predicated region
    $region34: #{tpu_custom_call.1} parent=1 // pred_check
      _
    $region35: #{tpu_custom_call.1} parent=1 // pred_check_branch
      %79 = sbr.rel (0) target = $region37
    $region36: #{tpu_custom_call.1} parent=1 // pred_region
      %81 = dma.done [#allocation3], 256
    $region37: #{tpu_custom_call.1} parent=1 // pred_fallthru
      _
    // Predicated region
    $region38: #{tpu_custom_call.1} parent=1 // pred_check
      _
    $region39: #{tpu_custom_call.1} parent=1 // pred_check_branch
      %83 = sbr.rel (0) target = $region41
    $region40: #{tpu_custom_call.1} parent=1 // pred_region
      %85 = dma.done [#allocation6], 256
    $region41: #{tpu_custom_call.1} parent=1 // pred_fallthru
      _
    // Predicated region
    $region42: #{tpu_custom_call.1} parent=1 // pred_check
      _
    $region43: #{tpu_custom_call.1} parent=1 // pred_check_branch
      %87 = sbr.rel (0) target = $region45
    $region44: #{tpu_custom_call.1} parent=1 // pred_region
      %89 = dma.done [#allocation6], 512
    $region45: #{tpu_custom_call.1} parent=1 // pred_fallthru
      _
    // Predicated region
    $region46: #{tpu_custom_call.1} parent=1 // pred_check
      _
    $region47: #{tpu_custom_call.1} parent=1 // pred_check_branch
      %91 = sbr.rel (0) target = $region49
    $region48: #{tpu_custom_call.1} parent=1 // pred_region
      %93 = dma.done [#allocation9], 32
    $region49: #{tpu_custom_call.1} parent=1 // pred_fallthru
      _
    %v94 = vld [vmem:[%s5] sm:$0xff]
    %v95 = vld [vmem:[%s5 + $0x10] sm:$0xff]
    %v96 = vld [vmem:[%s5 + $0x20] sm:$0xff]
    %v97 = vld [vmem:[%s5 + $0x30] sm:$0xff]
    %v98 = vld [vmem:[%s5 + $0x8] sm:$0xff]
    %v99 = vld [vmem:[%s5 + $0x18] sm:$0xff]
    %v100 = vld [vmem:[%s5 + $0x28] sm:$0xff]
    %v101 = vld [vmem:[%s5 + $0x38] sm:$0xff]
    %v102 = vld [vmem:[%s6] sm:$0xff]
    %v103 = vld [vmem:[%s6 + $0x8] sm:$0xff]
    %v104 = vld [vmem:[%s6 + $0x10] sm:$0xff]
    %v105 = vld [vmem:[%s6 + $0x18] sm:$0xff]
    %v106 = vld [vmem:[%s6 + $0x20] sm:$0xff]
    %v107 = vld [vmem:[%s6 + $0x28] sm:$0xff]
    %v108 = vld [vmem:[%s6 + $0x30] sm:$0xff]
    %v109 = vld [vmem:[%s6 + $0x38] sm:$0xff]
    %v110 = vld [vmem:[%s7] sm:$0x1]
    %v111 = vld [vmem:[%s7 + $0x1] sm:$0x1]
    %v112 = vld [vmem:[%s7 + $0x2] sm:$0x1]
    %v113 = vld [vmem:[#allocation2] sm:$0xff]
    %v114 = vld [vmem:[#allocation2 + $0x8] sm:$0xff]
    %v115 = vld [vmem:[%s1] sm:$0xff]
    %v116 = vld [vmem:[%s1 + $0x8] sm:$0xff]
    %v117 = vld [vmem:[%s1 + $0x10] sm:$0xff]
    %v118 = vld [vmem:[%s1 + $0x18] sm:$0xff]
    %v119 = vld [vmem:[#allocation5] sm:$0xff]
    %v120 = vld [vmem:[#allocation5 + $0x8] sm:$0xff]
    %v121 = vadd.f32 %v113, %v119
    %v122 = vadd.f32 %v114, %v120
    %v123 = vld [vmem:[#allocation7] sm:$0xff]
    %v124 = vld [vmem:[#allocation7 + $0x8] sm:$0xff]
    %v125 = vld [vmem:[#allocation7 + $0x10] sm:$0xff]
    %v126 = vld [vmem:[#allocation7 + $0x18] sm:$0xff]
    %v127 = vadd.f32 %v115, %v123
    %v128 = vadd.f32 %v116, %v124
    %v129 = vadd.f32 %v117, %v125
    %v130 = vadd.f32 %v118, %v126
    %v132 = vperm.slane %v110, 0
    %vm134 = vcmask 261120
    %v136 = vsel %vm134, %v121, 0
    %v139 = vsel %vm134, %v122, 0
    %141 = vmatpush.msra.mxu0 0.0
    %142 = vmatpush.msra.mxu0 0.0
    %143 = vmatpush.msra.mxu0 0.0
    %144 = vmatpush.msra.mxu0 0.0
    %145 = vmatpush.msra.mxu0 0.0
    %146 = vmatpush.msra.mxu0 0.0
    %147 = vmatpush.msra.mxu0 0.0
    %148 = vmatpush.msra.mxu0 0.0
    %149 = vmatpush.msra.mxu0 0.0
    %150 = vmatpush.msra.mxu0 0.0
    %151 = vmatpush.msra.mxu0 0.0
    %152 = vmatpush.msra.mxu0 0.0
    %153 = vmatpush.msra.mxu0 %v97
    %154 = vmatpush.msra.mxu0 %v96
    %155 = vmatpush.msra.mxu0 %v95
    %156 = vmatpush.msra.mxu0 %v94
    %157 = vmatmul.f32.gmra.mxu0 %v136
    %v158 = vpop.f32.mrf.mxu0
    %v159 = vadd.f32 %v132, %v158
    %160 = vmatmul.f32.gmra.mxu0 %v139
    %v161 = vpop.f32.mrf.mxu0
    %v162 = vadd.f32 %v132, %v161
    %163 = vdwg.mxu0
    %168 = vrot.lane.b32.xlu0 %v94, 96
    %v169 = vpop.permute.xlu0 %168
    %170 = vrot.lane.b32.xlu0 %v95, 96
    %v171 = vpop.permute.xlu0 %170
    %172 = vrot.lane.b32.xlu0 %v96, 96
    %v173 = vpop.permute.xlu0 %172
    %174 = vrot.lane.b32.xlu0 %v97, 96
    %v175 = vpop.permute.xlu0 %174
    %180 = vrot.lane.b32.xlu0 %v132, 96
    %v181 = vpop.permute.xlu0 %180
    %v184 = vsel %vm134, %v127, 0
    %v187 = vsel %vm134, %v128, 0
    %v190 = vsel %vm134, %v129, 0
    %v193 = vsel %vm134, %v130, 0
    %195 = vmatpush.msra.mxu0 0.0
    %196 = vmatpush.msra.mxu0 0.0
    %197 = vmatpush.msra.mxu0 0.0
    %198 = vmatpush.msra.mxu0 0.0
    %199 = vmatpush.msra.mxu0 0.0
    %200 = vmatpush.msra.mxu0 0.0
    %201 = vmatpush.msra.mxu0 0.0
    %202 = vmatpush.msra.mxu0 0.0
    %203 = vmatpush.msra.mxu0 0.0
    %204 = vmatpush.msra.mxu0 0.0
    %205 = vmatpush.msra.mxu0 0.0
    %206 = vmatpush.msra.mxu0 0.0
    %207 = vmatpush.msra.mxu0 %v175
    %208 = vmatpush.msra.mxu0 %v173
    %209 = vmatpush.msra.mxu0 %v171
    %210 = vmatpush.msra.mxu0 %v169
    %211 = vmatmul.f32.gmra.mxu0 %v184
    %v212 = vpop.f32.mrf.mxu0
    %v213 = vadd.f32 %v181, %v212
    %214 = vmatmul.f32.gmra.mxu0 %v187
    %v215 = vpop.f32.mrf.mxu0
    %v216 = vadd.f32 %v181, %v215
    %217 = vmatmul.f32.gmra.mxu0 %v190
    %v218 = vpop.f32.mrf.mxu0
    %v219 = vadd.f32 %v181, %v218
    %220 = vmatmul.f32.gmra.mxu0 %v193
    %v221 = vpop.f32.mrf.mxu0
    %v222 = vadd.f32 %v181, %v221
    %223 = vdwg.mxu0
    %224 = vrot.lane.b32.xlu0 %v94, 64
    %v225 = vpop.permute.xlu0 %224
    %226 = vrot.lane.b32.xlu0 %v95, 64
    %v227 = vpop.permute.xlu0 %226
    %228 = vrot.lane.b32.xlu0 %v96, 64
    %v229 = vpop.permute.xlu0 %228
    %230 = vrot.lane.b32.xlu0 %v97, 64
    %v231 = vpop.permute.xlu0 %230
    %236 = vrot.lane.b32.xlu0 %v132, 64
    %v237 = vpop.permute.xlu0 %236
    %v240 = vsel %vm134, %v115, 0
    %v243 = vsel %vm134, %v116, 0
    %v246 = vsel %vm134, %v117, 0
    %v249 = vsel %vm134, %v118, 0
    %251 = vmatpush.msra.mxu0 0.0
    %252 = vmatpush.msra.mxu0 0.0
    %253 = vmatpush.msra.mxu0 0.0
    %254 = vmatpush.msra.mxu0 0.0
    %255 = vmatpush.msra.mxu0 0.0
    %256 = vmatpush.msra.mxu0 0.0
    %257 = vmatpush.msra.mxu0 0.0
    %258 = vmatpush.msra.mxu0 0.0
    %259 = vmatpush.msra.mxu0 0.0
    %260 = vmatpush.msra.mxu0 0.0
    %261 = vmatpush.msra.mxu0 0.0
    %262 = vmatpush.msra.mxu0 0.0
    %263 = vmatpush.msra.mxu0 %v231
    %264 = vmatpush.msra.mxu0 %v229
    %265 = vmatpush.msra.mxu0 %v227
    %266 = vmatpush.msra.mxu0 %v225
    %267 = vmatmul.f32.gmra.mxu0 %v240
    %v268 = vpop.f32.mrf.mxu0
    %v269 = vadd.f32 %v237, %v268
    %270 = vmatmul.f32.gmra.mxu0 %v243
    %v271 = vpop.f32.mrf.mxu0
    %v272 = vadd.f32 %v237, %v271
    %273 = vmatmul.f32.gmra.mxu0 %v246
    %v274 = vpop.f32.mrf.mxu0
    %v275 = vadd.f32 %v237, %v274
    %276 = vmatmul.f32.gmra.mxu0 %v249
    %v277 = vpop.f32.mrf.mxu0
    %v278 = vadd.f32 %v237, %v277
    %279 = vdwg.mxu0
    %v280 = vmul.f32 %v159, 0.35355338
    %v281 = vmul.f32 %v162, 0.35355338
    %v282 = vld [vmem:[#allocation8] sm:$0x1]
    %v283 = vperm.slane %v282, 0
    %vm284 = vcmask 64512
    %v286 = vsel %vm284, %v280, 0
    %v289 = vsel %vm284, %v213, 0
    %v292 = vsel %vm284, %v216, 0
    %294 = vmatpush.xpose.msra.mxu0 0.0
    %295 = vmatpush.xpose.msra.mxu0 0.0
    %296 = vmatpush.xpose.msra.mxu0 0.0
    %297 = vmatpush.xpose.msra.mxu0 0.0
    %298 = vmatpush.xpose.msra.mxu0 0.0
    %299 = vmatpush.xpose.msra.mxu0 0.0
    %300 = vmatpush.xpose.msra.mxu0 0.0
    %301 = vmatpush.xpose.msra.mxu0 0.0
    %302 = vmatpush.xpose.msra.mxu0 0.0
    %303 = vmatpush.xpose.msra.mxu0 0.0
    %304 = vmatpush.xpose.msra.mxu0 0.0
    %305 = vmatpush.xpose.msra.mxu0 0.0
    %306 = vmatpush.xpose.msra.mxu0 0.0
    %307 = vmatpush.xpose.msra.mxu0 0.0
    %308 = vmatpush.xpose.msra.mxu0 %v292
    %309 = vmatpush.xpose.msra.mxu0 %v289
    %310 = vmatmul.f32.gmra.mxu0 %v286
    %v311 = vpop.f32.mrf.mxu0
    %v312 = vadd.f32 %v283, %v311
    %313 = vdwg.mxu0
    %vm314 = vcmask 130048
    %v315 = vsel %vm314, %v312, -inf
    %316 = vmax.xlane.f32.xlu0 %v315
    %v317 = vpop.xlane.xlu0 %316
    %v318 = vsub.f32 %v312, %v317
    %v319 = vmul.f32 %v318, 1.442695
    %v320 = vpow.pop %v319
    %v321 = vsel %vm314, %v320, 0.0
    %322 = vadd.xlane.f32.xlu0 %v321
    %v323 = vpop.xlane.xlu0 %322
    %v324 = vrcp.pop %v323
    %v325 = vmul.f32 %v323, %v324
    %v326 = vsub.f32 2.0, %v325
    %v327 = vmul.f32 %v324, %v326
    %v328 = vmul.f32 %v320, %v327
    %v329 = vadd.f32 %v328, 0.0
    %v331 = vsel %vm314, %v328, 0
    %333 = vmatpush.msra.mxu0 0.0
    %334 = vmatpush.msra.mxu0 0.0
    %335 = vmatpush.msra.mxu0 0.0
    %336 = vmatpush.msra.mxu0 0.0
    %337 = vmatpush.msra.mxu0 0.0
    %338 = vmatpush.msra.mxu0 0.0
    %339 = vmatpush.msra.mxu0 0.0
    %340 = vmatpush.msra.mxu0 0.0
    %341 = vmatpush.msra.mxu0 0.0
    %342 = vmatpush.msra.mxu0 0.0
    %343 = vmatpush.msra.mxu0 0.0
    %344 = vmatpush.msra.mxu0 0.0
    %345 = vmatpush.msra.mxu0 0.0
    %346 = vmatpush.msra.mxu0 0.0
    %347 = vmatpush.msra.mxu0 %v272
    %348 = vmatpush.msra.mxu0 %v269
    %349 = vmatmul.f32.gmra.mxu0 %v331
    %v350 = vpop.f32.mrf.mxu0
    %v351 = vadd.f32 0.0, %v350
    %352 = vdwg.mxu0
    %353 = vrot.lane.b32.xlu0 %v280, 120
    %v354 = vpop.permute.xlu0 %353
    %355 = vrot.lane.b32.xlu0 %v213, 120
    %v356 = vpop.permute.xlu0 %355
    %357 = vrot.lane.b32.xlu0 %v216, 120
    %v358 = vpop.permute.xlu0 %357
    %v359 = vsel %vm284, %v354, 0
    %v361 = vsel %vm284, %v356, 0
    %v363 = vsel %vm284, %v358, 0
    %365 = vmatpush.xpose.msra.mxu0 0.0
    %366 = vmatpush.xpose.msra.mxu0 0.0
    %367 = vmatpush.xpose.msra.mxu0 0.0
    %368 = vmatpush.xpose.msra.mxu0 0.0
    %369 = vmatpush.xpose.msra.mxu0 0.0
    %370 = vmatpush.xpose.msra.mxu0 0.0
    %371 = vmatpush.xpose.msra.mxu0 0.0
    %372 = vmatpush.xpose.msra.mxu0 0.0
    %373 = vmatpush.xpose.msra.mxu0 0.0
    %374 = vmatpush.xpose.msra.mxu0 0.0
    %375 = vmatpush.xpose.msra.mxu0 0.0
    %376 = vmatpush.xpose.msra.mxu0 0.0
    %377 = vmatpush.xpose.msra.mxu0 0.0
    %378 = vmatpush.xpose.msra.mxu0 0.0
    %379 = vmatpush.xpose.msra.mxu0 %v363
    %380 = vmatpush.xpose.msra.mxu0 %v361
    %381 = vmatmul.f32.gmra.mxu0 %v359
    %v382 = vpop.f32.mrf.mxu0
    %v383 = vadd.f32 %v283, %v382
    %384 = vdwg.mxu0
    %v385 = vsel %vm314, %v383, -inf
    %386 = vmax.xlane.f32.xlu0 %v385
    %v387 = vpop.xlane.xlu0 %386
    %v388 = vsub.f32 %v383, %v387
    %v389 = vmul.f32 %v388, 1.442695
    %v390 = vpow.pop %v389
    %v391 = vsel %vm314, %v390, 0.0
    %392 = vadd.xlane.f32.xlu0 %v391
    %v393 = vpop.xlane.xlu0 %392
    %v394 = vrcp.pop %v393
    %v395 = vmul.f32 %v393, %v394
    %v396 = vsub.f32 2.0, %v395
    %v397 = vmul.f32 %v394, %v396
    %v398 = vmul.f32 %v390, %v397
    %v399 = vadd.f32 %v329, %v398
    %402 = vrot.lane.b32.xlu0 %v269, 120
    %v403 = vpop.permute.xlu0 %402
    %404 = vrot.lane.b32.xlu0 %v272, 120
    %v405 = vpop.permute.xlu0 %404
    %v409 = vsel %vm314, %v398, 0
    %411 = vmatpush.msra.mxu0 0.0
    %412 = vmatpush.msra.mxu0 0.0
    %413 = vmatpush.msra.mxu0 0.0
    %414 = vmatpush.msra.mxu0 0.0
    %415 = vmatpush.msra.mxu0 0.0
    %416 = vmatpush.msra.mxu0 0.0
    %417 = vmatpush.msra.mxu0 0.0
    %418 = vmatpush.msra.mxu0 0.0
    %419 = vmatpush.msra.mxu0 0.0
    %420 = vmatpush.msra.mxu0 0.0
    %421 = vmatpush.msra.mxu0 0.0
    %422 = vmatpush.msra.mxu0 0.0
    %423 = vmatpush.msra.mxu0 0.0
    %424 = vmatpush.msra.mxu0 0.0
    %425 = vmatpush.msra.mxu0 %v405
    %426 = vmatpush.msra.mxu0 %v403
    %427 = vmatmul.f32.gmra.mxu0 %v409
    %v428 = vpop.f32.mrf.mxu0
    %v429 = vadd.f32 0.0, %v428
    %430 = vdwg.mxu0
    %431 = vrot.lane.b32.xlu0 %v95, 32
    %v432 = vpop.permute.xlu0 %431
    %v435 = vsel %vm284, %v429, 0
    %437 = vmatpush.msra.mxu0 0.0
    %438 = vmatpush.msra.mxu0 0.0
    %439 = vmatpush.msra.mxu0 0.0
    %440 = vmatpush.msra.mxu0 0.0
    %441 = vmatpush.msra.mxu0 0.0
    %442 = vmatpush.msra.mxu0 0.0
    %443 = vmatpush.msra.mxu0 0.0
    %444 = vmatpush.msra.mxu0 0.0
    %445 = vmatpush.msra.mxu0 0.0
    %446 = vmatpush.msra.mxu0 0.0
    %447 = vmatpush.msra.mxu0 0.0
    %448 = vmatpush.msra.mxu0 0.0
    %449 = vmatpush.msra.mxu0 0.0
    %450 = vmatpush.msra.mxu0 0.0
    %451 = vmatpush.msra.mxu0 0.0
    %452 = vmatpush.msra.mxu0 %v432
    %453 = vmatmul.f32.gmra.mxu0 %v435
    %v454 = vpop.f32.mrf.mxu0
    %v455 = vadd.f32 0.0, %v454
    %456 = vdwg.mxu0
    %457 = vrot.lane.b32.xlu0 %v94, 32
    %v458 = vpop.permute.xlu0 %457
    %v461 = vsel %vm284, %v351, 0
    %463 = vmatpush.msra.mxu0 0.0
    %464 = vmatpush.msra.mxu0 0.0
    %465 = vmatpush.msra.mxu0 0.0
    %466 = vmatpush.msra.mxu0 0.0
    %467 = vmatpush.msra.mxu0 0.0
    %468 = vmatpush.msra.mxu0 0.0
    %469 = vmatpush.msra.mxu0 0.0
    %470 = vmatpush.msra.mxu0 0.0
    %471 = vmatpush.msra.mxu0 0.0
    %472 = vmatpush.msra.mxu0 0.0
    %473 = vmatpush.msra.mxu0 0.0
    %474 = vmatpush.msra.mxu0 0.0
    %475 = vmatpush.msra.mxu0 0.0
    %476 = vmatpush.msra.mxu0 0.0
    %477 = vmatpush.msra.mxu0 0.0
    %478 = vmatpush.msra.mxu0 %v458
    %479 = vmatmul.f32.gmra.mxu0 %v461
    %v480 = vpop.f32.mrf.mxu0
    %v481 = vadd.f32 %v455, %v480
    %482 = vdwg.mxu0
    %483 = vrot.lane.b32.xlu0 %v280, 112
    %v484 = vpop.permute.xlu0 %483
    %485 = vrot.lane.b32.xlu0 %v213, 112
    %v486 = vpop.permute.xlu0 %485
    %487 = vrot.lane.b32.xlu0 %v216, 112
    %v488 = vpop.permute.xlu0 %487
    %v489 = vsel %vm284, %v484, 0
    %v491 = vsel %vm284, %v486, 0
    %v493 = vsel %vm284, %v488, 0
    %495 = vmatpush.xpose.msra.mxu0 0.0
    %496 = vmatpush.xpose.msra.mxu0 0.0
    %497 = vmatpush.xpose.msra.mxu0 0.0
    %498 = vmatpush.xpose.msra.mxu0 0.0
    %499 = vmatpush.xpose.msra.mxu0 0.0
    %500 = vmatpush.xpose.msra.mxu0 0.0
    %501 = vmatpush.xpose.msra.mxu0 0.0
    %502 = vmatpush.xpose.msra.mxu0 0.0
    %503 = vmatpush.xpose.msra.mxu0 0.0
    %504 = vmatpush.xpose.msra.mxu0 0.0
    %505 = vmatpush.xpose.msra.mxu0 0.0
    %506 = vmatpush.xpose.msra.mxu0 0.0
    %507 = vmatpush.xpose.msra.mxu0 0.0
    %508 = vmatpush.xpose.msra.mxu0 0.0
    %509 = vmatpush.xpose.msra.mxu0 %v493
    %510 = vmatpush.xpose.msra.mxu0 %v491
    %511 = vmatmul.f32.gmra.mxu0 %v489
    %v512 = vpop.f32.mrf.mxu0
    %v513 = vadd.f32 %v283, %v512
    %514 = vdwg.mxu0
    %v515 = vsel %vm314, %v513, -inf
    %516 = vmax.xlane.f32.xlu0 %v515
    %v517 = vpop.xlane.xlu0 %516
    %v518 = vsub.f32 %v513, %v517
    %v519 = vmul.f32 %v518, 1.442695
    %v520 = vpow.pop %v519
    %v521 = vsel %vm314, %v520, 0.0
    %522 = vadd.xlane.f32.xlu0 %v521
    %v523 = vpop.xlane.xlu0 %522
    %v524 = vrcp.pop %v523
    %v525 = vmul.f32 %v523, %v524
    %v526 = vsub.f32 2.0, %v525
    %v527 = vmul.f32 %v524, %v526
    %v528 = vmul.f32 %v520, %v527
    %v529 = vadd.f32 %v399, %v528
    %530 = vrot.lane.b32.xlu0 %v269, 112
    %v531 = vpop.permute.xlu0 %530
    %532 = vrot.lane.b32.xlu0 %v272, 112
    %v533 = vpop.permute.xlu0 %532
    %v537 = vsel %vm314, %v528, 0
    %539 = vmatpush.msra.mxu0 0.0
    %540 = vmatpush.msra.mxu0 0.0
    %541 = vmatpush.msra.mxu0 0.0
    %542 = vmatpush.msra.mxu0 0.0
    %543 = vmatpush.msra.mxu0 0.0
    %544 = vmatpush.msra.mxu0 0.0
    %545 = vmatpush.msra.mxu0 0.0
    %546 = vmatpush.msra.mxu0 0.0
    %547 = vmatpush.msra.mxu0 0.0
    %548 = vmatpush.msra.mxu0 0.0
    %549 = vmatpush.msra.mxu0 0.0
    %550 = vmatpush.msra.mxu0 0.0
    %551 = vmatpush.msra.mxu0 0.0
    %552 = vmatpush.msra.mxu0 0.0
    %553 = vmatpush.msra.mxu0 %v533
    %554 = vmatpush.msra.mxu0 %v531
    %555 = vmatmul.f32.gmra.mxu0 %v537
    %v556 = vpop.f32.mrf.mxu0
    %v557 = vadd.f32 0.0, %v556
    %558 = vdwg.mxu0
    %559 = vrot.lane.b32.xlu0 %v96, 32
    %v560 = vpop.permute.xlu0 %559
    %v563 = vsel %vm284, %v557, 0
    %565 = vmatpush.msra.mxu0 0.0
    %566 = vmatpush.msra.mxu0 0.0
    %567 = vmatpush.msra.mxu0 0.0
    %568 = vmatpush.msra.mxu0 0.0
    %569 = vmatpush.msra.mxu0 0.0
    %570 = vmatpush.msra.mxu0 0.0
    %571 = vmatpush.msra.mxu0 0.0
    %572 = vmatpush.msra.mxu0 0.0
    %573 = vmatpush.msra.mxu0 0.0
    %574 = vmatpush.msra.mxu0 0.0
    %575 = vmatpush.msra.mxu0 0.0
    %576 = vmatpush.msra.mxu0 0.0
    %577 = vmatpush.msra.mxu0 0.0
    %578 = vmatpush.msra.mxu0 0.0
    %579 = vmatpush.msra.mxu0 0.0
    %580 = vmatpush.msra.mxu0 %v560
    %581 = vmatmul.f32.gmra.mxu0 %v563
    %v582 = vpop.f32.mrf.mxu0
    %v583 = vadd.f32 0.0, %v582
    %584 = vdwg.mxu0
    %v585 = vadd.f32 %v481, %v583
    %586 = vrot.lane.b32.xlu0 %v280, 104
    %v587 = vpop.permute.xlu0 %586
    %588 = vrot.lane.b32.xlu0 %v213, 104
    %v589 = vpop.permute.xlu0 %588
    %590 = vrot.lane.b32.xlu0 %v216, 104
    %v591 = vpop.permute.xlu0 %590
    %v592 = vsel %vm284, %v587, 0
    %v594 = vsel %vm284, %v589, 0
    %v596 = vsel %vm284, %v591, 0
    %598 = vmatpush.xpose.msra.mxu0 0.0
    %599 = vmatpush.xpose.msra.mxu0 0.0
    %600 = vmatpush.xpose.msra.mxu0 0.0
    %601 = vmatpush.xpose.msra.mxu0 0.0
    %602 = vmatpush.xpose.msra.mxu0 0.0
    %603 = vmatpush.xpose.msra.mxu0 0.0
    %604 = vmatpush.xpose.msra.mxu0 0.0
    %605 = vmatpush.xpose.msra.mxu0 0.0
    %606 = vmatpush.xpose.msra.mxu0 0.0
    %607 = vmatpush.xpose.msra.mxu0 0.0
    %608 = vmatpush.xpose.msra.mxu0 0.0
    %609 = vmatpush.xpose.msra.mxu0 0.0
    %610 = vmatpush.xpose.msra.mxu0 0.0
    %611 = vmatpush.xpose.msra.mxu0 0.0
    %612 = vmatpush.xpose.msra.mxu0 %v596
    %613 = vmatpush.xpose.msra.mxu0 %v594
    %614 = vmatmul.f32.gmra.mxu0 %v592
    %v615 = vpop.f32.mrf.mxu0
    %v616 = vadd.f32 %v283, %v615
    %617 = vdwg.mxu0
    %v618 = vsel %vm314, %v616, -inf
    %619 = vmax.xlane.f32.xlu0 %v618
    %v620 = vpop.xlane.xlu0 %619
    %v621 = vsub.f32 %v616, %v620
    %v622 = vmul.f32 %v621, 1.442695
    %v623 = vpow.pop %v622
    %v624 = vsel %vm314, %v623, 0.0
    %625 = vadd.xlane.f32.xlu0 %v624
    %v626 = vpop.xlane.xlu0 %625
    %v627 = vrcp.pop %v626
    %v628 = vmul.f32 %v626, %v627
    %v629 = vsub.f32 2.0, %v628
    %v630 = vmul.f32 %v627, %v629
    %v631 = vmul.f32 %v623, %v630
    %v632 = vadd.f32 %v529, %v631
    %633 = vrot.lane.b32.xlu0 %v269, 104
    %v634 = vpop.permute.xlu0 %633
    %635 = vrot.lane.b32.xlu0 %v272, 104
    %v636 = vpop.permute.xlu0 %635
    %v640 = vsel %vm314, %v631, 0
    %642 = vmatpush.msra.mxu0 0.0
    %643 = vmatpush.msra.mxu0 0.0
    %644 = vmatpush.msra.mxu0 0.0
    %645 = vmatpush.msra.mxu0 0.0
    %646 = vmatpush.msra.mxu0 0.0
    %647 = vmatpush.msra.mxu0 0.0
    %648 = vmatpush.msra.mxu0 0.0
    %649 = vmatpush.msra.mxu0 0.0
    %650 = vmatpush.msra.mxu0 0.0
    %651 = vmatpush.msra.mxu0 0.0
    %652 = vmatpush.msra.mxu0 0.0
    %653 = vmatpush.msra.mxu0 0.0
    %654 = vmatpush.msra.mxu0 0.0
    %655 = vmatpush.msra.mxu0 0.0
    %656 = vmatpush.msra.mxu0 %v636
    %657 = vmatpush.msra.mxu0 %v634
    %658 = vmatmul.f32.gmra.mxu0 %v640
    %v659 = vpop.f32.mrf.mxu0
    %v660 = vadd.f32 0.0, %v659
    %661 = vdwg.mxu0
    %662 = vrot.lane.b32.xlu0 %v97, 32
    %v663 = vpop.permute.xlu0 %662
    %v666 = vsel %vm284, %v660, 0
    %668 = vmatpush.msra.mxu0 0.0
    %669 = vmatpush.msra.mxu0 0.0
    %670 = vmatpush.msra.mxu0 0.0
    %671 = vmatpush.msra.mxu0 0.0
    %672 = vmatpush.msra.mxu0 0.0
    %673 = vmatpush.msra.mxu0 0.0
    %674 = vmatpush.msra.mxu0 0.0
    %675 = vmatpush.msra.mxu0 0.0
    %676 = vmatpush.msra.mxu0 0.0
    %677 = vmatpush.msra.mxu0 0.0
    %678 = vmatpush.msra.mxu0 0.0
    %679 = vmatpush.msra.mxu0 0.0
    %680 = vmatpush.msra.mxu0 0.0
    %681 = vmatpush.msra.mxu0 0.0
    %682 = vmatpush.msra.mxu0 0.0
    %683 = vmatpush.msra.mxu0 %v663
    %684 = vmatmul.f32.gmra.mxu0 %v666
    %v685 = vpop.f32.mrf.mxu0
    %v686 = vadd.f32 0.0, %v685
    %687 = vdwg.mxu0
    %v688 = vadd.f32 %v585, %v686
    %v689 = vmul.f32 %v632, 0.25
    %690 = vst.msk [vmem:[#allocation11] sm:$0xff] %vm314, %v689
    %v691 = vld [vmem:[#allocation8 + $0x1] sm:$0x1]
    %v692 = vperm.slane %v691, 0
    %v694 = vsel %vm284, %v281, 0
    %v697 = vsel %vm284, %v219, 0
    %v700 = vsel %vm284, %v222, 0
    %702 = vmatpush.xpose.msra.mxu0 0.0
    %703 = vmatpush.xpose.msra.mxu0 0.0
    %704 = vmatpush.xpose.msra.mxu0 0.0
    %705 = vmatpush.xpose.msra.mxu0 0.0
    %706 = vmatpush.xpose.msra.mxu0 0.0
    %707 = vmatpush.xpose.msra.mxu0 0.0
    %708 = vmatpush.xpose.msra.mxu0 0.0
    %709 = vmatpush.xpose.msra.mxu0 0.0
    %710 = vmatpush.xpose.msra.mxu0 0.0
    %711 = vmatpush.xpose.msra.mxu0 0.0
    %712 = vmatpush.xpose.msra.mxu0 0.0
    %713 = vmatpush.xpose.msra.mxu0 0.0
    %714 = vmatpush.xpose.msra.mxu0 0.0
    %715 = vmatpush.xpose.msra.mxu0 0.0
    %716 = vmatpush.xpose.msra.mxu0 %v700
    %717 = vmatpush.xpose.msra.mxu0 %v697
    %718 = vmatmul.f32.gmra.mxu0 %v694
    %v719 = vpop.f32.mrf.mxu0
    %v720 = vadd.f32 %v692, %v719
    %721 = vdwg.mxu0
    %v722 = vsel %vm314, %v720, -inf
    %723 = vmax.xlane.f32.xlu0 %v722
    %v724 = vpop.xlane.xlu0 %723
    %v725 = vsub.f32 %v720, %v724
    %v726 = vmul.f32 %v725, 1.442695
    %v727 = vpow.pop %v726
    %v728 = vsel %vm314, %v727, 0.0
    %729 = vadd.xlane.f32.xlu0 %v728
    %v730 = vpop.xlane.xlu0 %729
    %v731 = vrcp.pop %v730
    %v732 = vmul.f32 %v730, %v731
    %v733 = vsub.f32 2.0, %v732
    %v734 = vmul.f32 %v731, %v733
    %v735 = vmul.f32 %v727, %v734
    %v736 = vadd.f32 %v735, 0.0
    %v738 = vsel %vm314, %v735, 0
    %740 = vmatpush.msra.mxu0 0.0
    %741 = vmatpush.msra.mxu0 0.0
    %742 = vmatpush.msra.mxu0 0.0
    %743 = vmatpush.msra.mxu0 0.0
    %744 = vmatpush.msra.mxu0 0.0
    %745 = vmatpush.msra.mxu0 0.0
    %746 = vmatpush.msra.mxu0 0.0
    %747 = vmatpush.msra.mxu0 0.0
    %748 = vmatpush.msra.mxu0 0.0
    %749 = vmatpush.msra.mxu0 0.0
    %750 = vmatpush.msra.mxu0 0.0
    %751 = vmatpush.msra.mxu0 0.0
    %752 = vmatpush.msra.mxu0 0.0
    %753 = vmatpush.msra.mxu0 0.0
    %754 = vmatpush.msra.mxu0 %v278
    %755 = vmatpush.msra.mxu0 %v275
    %756 = vmatmul.f32.gmra.mxu0 %v738
    %v757 = vpop.f32.mrf.mxu0
    %v758 = vadd.f32 0.0, %v757
    %759 = vdwg.mxu0
    %760 = vrot.lane.b32.xlu0 %v281, 120
    %v761 = vpop.permute.xlu0 %760
    %762 = vrot.lane.b32.xlu0 %v219, 120
    %v763 = vpop.permute.xlu0 %762
    %764 = vrot.lane.b32.xlu0 %v222, 120
    %v765 = vpop.permute.xlu0 %764
    %v766 = vsel %vm284, %v761, 0
    %v768 = vsel %vm284, %v763, 0
    %v770 = vsel %vm284, %v765, 0
    %772 = vmatpush.xpose.msra.mxu0 0.0
    %773 = vmatpush.xpose.msra.mxu0 0.0
    %774 = vmatpush.xpose.msra.mxu0 0.0
    %775 = vmatpush.xpose.msra.mxu0 0.0
    %776 = vmatpush.xpose.msra.mxu0 0.0
    %777 = vmatpush.xpose.msra.mxu0 0.0
    %778 = vmatpush.xpose.msra.mxu0 0.0
    %779 = vmatpush.xpose.msra.mxu0 0.0
    %780 = vmatpush.xpose.msra.mxu0 0.0
    %781 = vmatpush.xpose.msra.mxu0 0.0
    %782 = vmatpush.xpose.msra.mxu0 0.0
    %783 = vmatpush.xpose.msra.mxu0 0.0
    %784 = vmatpush.xpose.msra.mxu0 0.0
    %785 = vmatpush.xpose.msra.mxu0 0.0
    %786 = vmatpush.xpose.msra.mxu0 %v770
    %787 = vmatpush.xpose.msra.mxu0 %v768
    %788 = vmatmul.f32.gmra.mxu0 %v766
    %v789 = vpop.f32.mrf.mxu0
    %v790 = vadd.f32 %v692, %v789
    %791 = vdwg.mxu0
    %v792 = vsel %vm314, %v790, -inf
    %793 = vmax.xlane.f32.xlu0 %v792
    %v794 = vpop.xlane.xlu0 %793
    %v795 = vsub.f32 %v790, %v794
    %v796 = vmul.f32 %v795, 1.442695
    %v797 = vpow.pop %v796
    %v798 = vsel %vm314, %v797, 0.0
    %799 = vadd.xlane.f32.xlu0 %v798
    %v800 = vpop.xlane.xlu0 %799
    %v801 = vrcp.pop %v800
    %v802 = vmul.f32 %v800, %v801
    %v803 = vsub.f32 2.0, %v802
    %v804 = vmul.f32 %v801, %v803
    %v805 = vmul.f32 %v797, %v804
    %v806 = vadd.f32 %v736, %v805
    %809 = vrot.lane.b32.xlu0 %v275, 120
    %v810 = vpop.permute.xlu0 %809
    %811 = vrot.lane.b32.xlu0 %v278, 120
    %v812 = vpop.permute.xlu0 %811
    %v816 = vsel %vm314, %v805, 0
    %818 = vmatpush.msra.mxu0 0.0
    %819 = vmatpush.msra.mxu0 0.0
    %820 = vmatpush.msra.mxu0 0.0
    %821 = vmatpush.msra.mxu0 0.0
    %822 = vmatpush.msra.mxu0 0.0
    %823 = vmatpush.msra.mxu0 0.0
    %824 = vmatpush.msra.mxu0 0.0
    %825 = vmatpush.msra.mxu0 0.0
    %826 = vmatpush.msra.mxu0 0.0
    %827 = vmatpush.msra.mxu0 0.0
    %828 = vmatpush.msra.mxu0 0.0
    %829 = vmatpush.msra.mxu0 0.0
    %830 = vmatpush.msra.mxu0 0.0
    %831 = vmatpush.msra.mxu0 0.0
    %832 = vmatpush.msra.mxu0 %v812
    %833 = vmatpush.msra.mxu0 %v810
    %834 = vmatmul.f32.gmra.mxu0 %v816
    %v835 = vpop.f32.mrf.mxu0
    %v836 = vadd.f32 0.0, %v835
    %837 = vdwg.mxu0
    %v839 = vsel %vm284, %v836, 0
    %841 = vmatpush.msra.mxu0 0.0
    %842 = vmatpush.msra.mxu0 0.0
    %843 = vmatpush.msra.mxu0 0.0
    %844 = vmatpush.msra.mxu0 0.0
    %845 = vmatpush.msra.mxu0 0.0
    %846 = vmatpush.msra.mxu0 0.0
    %847 = vmatpush.msra.mxu0 0.0
    %848 = vmatpush.msra.mxu0 0.0
    %849 = vmatpush.msra.mxu0 0.0
    %850 = vmatpush.msra.mxu0 0.0
    %851 = vmatpush.msra.mxu0 0.0
    %852 = vmatpush.msra.mxu0 0.0
    %853 = vmatpush.msra.mxu0 0.0
    %854 = vmatpush.msra.mxu0 0.0
    %855 = vmatpush.msra.mxu0 0.0
    %856 = vmatpush.msra.mxu0 %v432
    %857 = vmatmul.f32.gmra.mxu0 %v839
    %v858 = vpop.f32.mrf.mxu0
    %v859 = vadd.f32 0.0, %v858
    %860 = vdwg.mxu0
    %v862 = vsel %vm284, %v758, 0
    %864 = vmatpush.msra.mxu0 0.0
    %865 = vmatpush.msra.mxu0 0.0
    %866 = vmatpush.msra.mxu0 0.0
    %867 = vmatpush.msra.mxu0 0.0
    %868 = vmatpush.msra.mxu0 0.0
    %869 = vmatpush.msra.mxu0 0.0
    %870 = vmatpush.msra.mxu0 0.0
    %871 = vmatpush.msra.mxu0 0.0
    %872 = vmatpush.msra.mxu0 0.0
    %873 = vmatpush.msra.mxu0 0.0
    %874 = vmatpush.msra.mxu0 0.0
    %875 = vmatpush.msra.mxu0 0.0
    %876 = vmatpush.msra.mxu0 0.0
    %877 = vmatpush.msra.mxu0 0.0
    %878 = vmatpush.msra.mxu0 0.0
    %879 = vmatpush.msra.mxu0 %v458
    %880 = vmatmul.f32.gmra.mxu0 %v862
    %v881 = vpop.f32.mrf.mxu0
    %v882 = vadd.f32 %v859, %v881
    %883 = vdwg.mxu0
    %884 = vrot.lane.b32.xlu0 %v281, 112
    %v885 = vpop.permute.xlu0 %884
    %886 = vrot.lane.b32.xlu0 %v219, 112
    %v887 = vpop.permute.xlu0 %886
    %888 = vrot.lane.b32.xlu0 %v222, 112
    %v889 = vpop.permute.xlu0 %888
    %v890 = vsel %vm284, %v885, 0
    %v892 = vsel %vm284, %v887, 0
    %v894 = vsel %vm284, %v889, 0
    %896 = vmatpush.xpose.msra.mxu0 0.0
    %897 = vmatpush.xpose.msra.mxu0 0.0
    %898 = vmatpush.xpose.msra.mxu0 0.0
    %899 = vmatpush.xpose.msra.mxu0 0.0
    %900 = vmatpush.xpose.msra.mxu0 0.0
    %901 = vmatpush.xpose.msra.mxu0 0.0
    %902 = vmatpush.xpose.msra.mxu0 0.0
    %903 = vmatpush.xpose.msra.mxu0 0.0
    %904 = vmatpush.xpose.msra.mxu0 0.0
    %905 = vmatpush.xpose.msra.mxu0 0.0
    %906 = vmatpush.xpose.msra.mxu0 0.0
    %907 = vmatpush.xpose.msra.mxu0 0.0
    %908 = vmatpush.xpose.msra.mxu0 0.0
    %909 = vmatpush.xpose.msra.mxu0 0.0
    %910 = vmatpush.xpose.msra.mxu0 %v894
    %911 = vmatpush.xpose.msra.mxu0 %v892
    %912 = vmatmul.f32.gmra.mxu0 %v890
    %v913 = vpop.f32.mrf.mxu0
    %v914 = vadd.f32 %v692, %v913
    %915 = vdwg.mxu0
    %v916 = vsel %vm314, %v914, -inf
    %917 = vmax.xlane.f32.xlu0 %v916
    %v918 = vpop.xlane.xlu0 %917
    %v919 = vsub.f32 %v914, %v918
    %v920 = vmul.f32 %v919, 1.442695
    %v921 = vpow.pop %v920
    %v922 = vsel %vm314, %v921, 0.0
    %923 = vadd.xlane.f32.xlu0 %v922
    %v924 = vpop.xlane.xlu0 %923
    %v925 = vrcp.pop %v924
    %v926 = vmul.f32 %v924, %v925
    %v927 = vsub.f32 2.0, %v926
    %v928 = vmul.f32 %v925, %v927
    %v929 = vmul.f32 %v921, %v928
    %v930 = vadd.f32 %v806, %v929
    %931 = vrot.lane.b32.xlu0 %v275, 112
    %v932 = vpop.permute.xlu0 %931
    %933 = vrot.lane.b32.xlu0 %v278, 112
    %v934 = vpop.permute.xlu0 %933
    %v938 = vsel %vm314, %v929, 0
    %940 = vmatpush.msra.mxu0 0.0
    %941 = vmatpush.msra.mxu0 0.0
    %942 = vmatpush.msra.mxu0 0.0
    %943 = vmatpush.msra.mxu0 0.0
    %944 = vmatpush.msra.mxu0 0.0
    %945 = vmatpush.msra.mxu0 0.0
    %946 = vmatpush.msra.mxu0 0.0
    %947 = vmatpush.msra.mxu0 0.0
    %948 = vmatpush.msra.mxu0 0.0
    %949 = vmatpush.msra.mxu0 0.0
    %950 = vmatpush.msra.mxu0 0.0
    %951 = vmatpush.msra.mxu0 0.0
    %952 = vmatpush.msra.mxu0 0.0
    %953 = vmatpush.msra.mxu0 0.0
    %954 = vmatpush.msra.mxu0 %v934
    %955 = vmatpush.msra.mxu0 %v932
    %956 = vmatmul.f32.gmra.mxu0 %v938
    %v957 = vpop.f32.mrf.mxu0
    %v958 = vadd.f32 0.0, %v957
    %959 = vdwg.mxu0
    %v961 = vsel %vm284, %v958, 0
    %963 = vmatpush.msra.mxu0 0.0
    %964 = vmatpush.msra.mxu0 0.0
    %965 = vmatpush.msra.mxu0 0.0
    %966 = vmatpush.msra.mxu0 0.0
    %967 = vmatpush.msra.mxu0 0.0
    %968 = vmatpush.msra.mxu0 0.0
    %969 = vmatpush.msra.mxu0 0.0
    %970 = vmatpush.msra.mxu0 0.0
    %971 = vmatpush.msra.mxu0 0.0
    %972 = vmatpush.msra.mxu0 0.0
    %973 = vmatpush.msra.mxu0 0.0
    %974 = vmatpush.msra.mxu0 0.0
    %975 = vmatpush.msra.mxu0 0.0
    %976 = vmatpush.msra.mxu0 0.0
    %977 = vmatpush.msra.mxu0 0.0
    %978 = vmatpush.msra.mxu0 %v560
    %979 = vmatmul.f32.gmra.mxu0 %v961
    %v980 = vpop.f32.mrf.mxu0
    %v981 = vadd.f32 0.0, %v980
    %982 = vdwg.mxu0
    %v983 = vadd.f32 %v882, %v981
    %984 = vrot.lane.b32.xlu0 %v281, 104
    %v985 = vpop.permute.xlu0 %984
    %986 = vrot.lane.b32.xlu0 %v219, 104
    %v987 = vpop.permute.xlu0 %986
    %988 = vrot.lane.b32.xlu0 %v222, 104
    %v989 = vpop.permute.xlu0 %988
    %v990 = vsel %vm284, %v985, 0
    %v992 = vsel %vm284, %v987, 0
    %v994 = vsel %vm284, %v989, 0
    %996 = vmatpush.xpose.msra.mxu0 0.0
    %997 = vmatpush.xpose.msra.mxu0 0.0
    %998 = vmatpush.xpose.msra.mxu0 0.0
    %999 = vmatpush.xpose.msra.mxu0 0.0
    %1000 = vmatpush.xpose.msra.mxu0 0.0
    %1001 = vmatpush.xpose.msra.mxu0 0.0
    %1002 = vmatpush.xpose.msra.mxu0 0.0
    %1003 = vmatpush.xpose.msra.mxu0 0.0
    %1004 = vmatpush.xpose.msra.mxu0 0.0
    %1005 = vmatpush.xpose.msra.mxu0 0.0
    %1006 = vmatpush.xpose.msra.mxu0 0.0
    %1007 = vmatpush.xpose.msra.mxu0 0.0
    %1008 = vmatpush.xpose.msra.mxu0 0.0
    %1009 = vmatpush.xpose.msra.mxu0 0.0
    %1010 = vmatpush.xpose.msra.mxu0 %v994
    %1011 = vmatpush.xpose.msra.mxu0 %v992
    %1012 = vmatmul.f32.gmra.mxu0 %v990
    %v1013 = vpop.f32.mrf.mxu0
    %v1014 = vadd.f32 %v692, %v1013
    %1015 = vdwg.mxu0
    %v1016 = vsel %vm314, %v1014, -inf
    %1017 = vmax.xlane.f32.xlu0 %v1016
    %v1018 = vpop.xlane.xlu0 %1017
    %v1019 = vsub.f32 %v1014, %v1018
    %v1020 = vmul.f32 %v1019, 1.442695
    %v1021 = vpow.pop %v1020
    %v1022 = vsel %vm314, %v1021, 0.0
    %1023 = vadd.xlane.f32.xlu0 %v1022
    %v1024 = vpop.xlane.xlu0 %1023
    %v1025 = vrcp.pop %v1024
    %v1026 = vmul.f32 %v1024, %v1025
    %v1027 = vsub.f32 2.0, %v1026
    %v1028 = vmul.f32 %v1025, %v1027
    %v1029 = vmul.f32 %v1021, %v1028
    %v1030 = vadd.f32 %v930, %v1029
    %1031 = vrot.lane.b32.xlu0 %v275, 104
    %v1032 = vpop.permute.xlu0 %1031
    %1033 = vrot.lane.b32.xlu0 %v278, 104
    %v1034 = vpop.permute.xlu0 %1033
    %v1038 = vsel %vm314, %v1029, 0
    %1040 = vmatpush.msra.mxu0 0.0
    %1041 = vmatpush.msra.mxu0 0.0
    %1042 = vmatpush.msra.mxu0 0.0
    %1043 = vmatpush.msra.mxu0 0.0
    %1044 = vmatpush.msra.mxu0 0.0
    %1045 = vmatpush.msra.mxu0 0.0
    %1046 = vmatpush.msra.mxu0 0.0
    %1047 = vmatpush.msra.mxu0 0.0
    %1048 = vmatpush.msra.mxu0 0.0
    %1049 = vmatpush.msra.mxu0 0.0
    %1050 = vmatpush.msra.mxu0 0.0
    %1051 = vmatpush.msra.mxu0 0.0
    %1052 = vmatpush.msra.mxu0 0.0
    %1053 = vmatpush.msra.mxu0 0.0
    %1054 = vmatpush.msra.mxu0 %v1034
    %1055 = vmatpush.msra.mxu0 %v1032
    %1056 = vmatmul.f32.gmra.mxu0 %v1038
    %v1057 = vpop.f32.mrf.mxu0
    %v1058 = vadd.f32 0.0, %v1057
    %1059 = vdwg.mxu0
    %v1061 = vsel %vm284, %v1058, 0
    %1063 = vmatpush.msra.mxu0 0.0
    %1064 = vmatpush.msra.mxu0 0.0
    %1065 = vmatpush.msra.mxu0 0.0
    %1066 = vmatpush.msra.mxu0 0.0
    %1067 = vmatpush.msra.mxu0 0.0
    %1068 = vmatpush.msra.mxu0 0.0
    %1069 = vmatpush.msra.mxu0 0.0
    %1070 = vmatpush.msra.mxu0 0.0
    %1071 = vmatpush.msra.mxu0 0.0
    %1072 = vmatpush.msra.mxu0 0.0
    %1073 = vmatpush.msra.mxu0 0.0
    %1074 = vmatpush.msra.mxu0 0.0
    %1075 = vmatpush.msra.mxu0 0.0
    %1076 = vmatpush.msra.mxu0 0.0
    %1077 = vmatpush.msra.mxu0 0.0
    %1078 = vmatpush.msra.mxu0 %v663
    %1079 = vmatmul.f32.gmra.mxu0 %v1061
    %v1080 = vpop.f32.mrf.mxu0
    %v1081 = vadd.f32 0.0, %v1080
    %1082 = vdwg.mxu0
    %v1083 = vadd.f32 %v983, %v1081
    %v1084 = vmul.f32 %v1030, 0.25
    %s1085 = scalar_lea.vmem [#allocation11], 8
    %1086 = vst.msk [vmem:[%s1085] sm:$0xff] %vm314, %v1084
    %1087 = vrot.lane.b32.xlu0 %v132, 32
    %v1088 = vpop.permute.xlu0 %1087
    %v1090 = vadd.f32 %v688, %v1088
    %v1091 = vadd.f32 %v1083, %v1088
    %v1092 = vadd.f32 %v113, %v1090
    %v1093 = vadd.f32 %v114, %v1091
    %v1094 = vsel %vm134, %v1092, 0.0
    %1095 = vadd.xlane.f32.xlu0 %v1094
    %v1096 = vpop.xlane.xlu0 %1095
    %v1097 = vsel %vm134, %v1093, 0.0
    %1098 = vadd.xlane.f32.xlu0 %v1097
    %v1099 = vpop.xlane.xlu0 %1098
    %v1100 = vrcp.pop 32.0
    %v1101 = vmul.f32 32.0, %v1100
    %v1102 = vsub.f32 1.0, %v1101
    %v1103 = vmul.f32 %v1100, %v1102
    %v1104 = vadd.f32 %v1100, %v1103
    %vm1105 = vweird.f32 %v1100
    %v1106 = vsel %vm1105, %v1100, %v1104
    %v1107 = vmul.f32 %v1096, %v1106
    %v1108 = vmul.f32 %v1099, %v1106
    %v1109 = vsub.f32 %v1092, %v1107
    %v1110 = vsub.f32 %v1093, %v1108
    %v1111 = vmul.f32 %v1109, %v1109
    %v1112 = vmul.f32 %v1110, %v1110
    %v1113 = vsel %vm134, %v1111, 0.0
    %1114 = vadd.xlane.f32.xlu0 %v1113
    %v1115 = vpop.xlane.xlu0 %1114
    %v1116 = vsel %vm134, %v1112, 0.0
    %1117 = vadd.xlane.f32.xlu0 %v1116
    %v1118 = vpop.xlane.xlu0 %1117
    %v1119 = vmul.f32 %v1115, %v1106
    %v1120 = vmul.f32 %v1118, %v1106
    %v1121 = vadd.f32 %v1119, 1e-05
    %v1122 = vadd.f32 %v1120, 1e-05
    %v1123 = vrsqrt.pop %v1121
    %v1124 = vmul.f32 %v1123, %v1121
    %v1125 = vmul.f32 %v1124, %v1123
    %v1126 = vmul.f32 0.5, %v1125
    %v1127 = vsub.f32 1.5, %v1126
    %v1128 = vmul.f32 %v1123, %v1127
    %vm1129 = vweird.f32 %v1121
    %vm1130 = vweird.f32 %v1123
    %vm1131 = vmor %vm1129, %vm1130
    %v1132 = vsel %vm1131, %v1123, %v1128
    %v1133 = vrsqrt.pop %v1122
    %v1134 = vmul.f32 %v1133, %v1122
    %v1135 = vmul.f32 %v1134, %v1133
    %v1136 = vmul.f32 0.5, %v1135
    %v1137 = vsub.f32 1.5, %v1136
    %v1138 = vmul.f32 %v1133, %v1137
    %vm1139 = vweird.f32 %v1122
    %vm1140 = vweird.f32 %v1133
    %vm1141 = vmor %vm1139, %vm1140
    %v1142 = vsel %vm1141, %v1133, %v1138
    %v1143 = vmul.f32 %v1109, %v1132
    %v1144 = vmul.f32 %v1110, %v1142
    %v1146 = vperm.slane %v111, 0
    %v1148 = vmul.f32 %v1143, %v1146
    %v1149 = vmul.f32 %v1144, %v1146
    %1150 = vrot.lane.b32.xlu0 %v1146, 96
    %v1151 = vpop.permute.xlu0 %1150
    %v1153 = vadd.f32 %v1148, %v1151
    %v1154 = vadd.f32 %v1149, %v1151
    %1155 = vrot.lane.b32.xlu0 %v1146, 64
    %v1156 = vpop.permute.xlu0 %1155
    %v1159 = vsel %vm134, %v1153, 0
    %v1162 = vsel %vm134, %v1154, 0
    %1164 = vmatpush.msra.mxu0 0.0
    %1165 = vmatpush.msra.mxu0 0.0
    %1166 = vmatpush.msra.mxu0 0.0
    %1167 = vmatpush.msra.mxu0 0.0
    %1168 = vmatpush.msra.mxu0 0.0
    %1169 = vmatpush.msra.mxu0 0.0
    %1170 = vmatpush.msra.mxu0 0.0
    %1171 = vmatpush.msra.mxu0 0.0
    %1172 = vmatpush.msra.mxu0 0.0
    %1173 = vmatpush.msra.mxu0 0.0
    %1174 = vmatpush.msra.mxu0 0.0
    %1175 = vmatpush.msra.mxu0 0.0
    %1176 = vmatpush.msra.mxu0 %v101
    %1177 = vmatpush.msra.mxu0 %v100
    %1178 = vmatpush.msra.mxu0 %v99
    %1179 = vmatpush.msra.mxu0 %v98
    %1180 = vmatmul.f32.gmra.mxu0 %v1159
    %v1181 = vpop.f32.mrf.mxu0
    %v1182 = vadd.f32 %v1156, %v1181
    %1183 = vmatmul.f32.gmra.mxu0 %v1162
    %v1184 = vpop.f32.mrf.mxu0
    %v1185 = vadd.f32 %v1156, %v1184
    %1186 = vdwg.mxu0
    %v1187 = vmax.f32 %v1182, 0.0
    %v1188 = vmax.f32 %v1185, 0.0
    %v1190 = vperm.slane %v112, 0
    %vm1192 = vcmask 523264
    %v1194 = vsel %vm1192, %v1187, 0
    %v1197 = vsel %vm1192, %v1188, 0
    %1199 = vmatpush.msra.mxu0 0.0
    %1200 = vmatpush.msra.mxu0 0.0
    %1201 = vmatpush.msra.mxu0 0.0
    %1202 = vmatpush.msra.mxu0 0.0
    %1203 = vmatpush.msra.mxu0 0.0
    %1204 = vmatpush.msra.mxu0 0.0
    %1205 = vmatpush.msra.mxu0 0.0
    %1206 = vmatpush.msra.mxu0 0.0
    %1207 = vmatpush.msra.mxu0 %v109
    %1208 = vmatpush.msra.mxu0 %v108
    %1209 = vmatpush.msra.mxu0 %v107
    %1210 = vmatpush.msra.mxu0 %v106
    %1211 = vmatpush.msra.mxu0 %v105
    %1212 = vmatpush.msra.mxu0 %v104
    %1213 = vmatpush.msra.mxu0 %v103
    %1214 = vmatpush.msra.mxu0 %v102
    %1215 = vmatmul.f32.gmra.mxu0 %v1194
    %v1216 = vpop.f32.mrf.mxu0
    %v1217 = vadd.f32 %v1190, %v1216
    %1218 = vmatmul.f32.gmra.mxu0 %v1197
    %v1219 = vpop.f32.mrf.mxu0
    %v1220 = vadd.f32 %v1190, %v1219
    %1221 = vdwg.mxu0
    %v1222 = vadd.f32 %v1153, %v1217
    %v1223 = vadd.f32 %v1154, %v1220
    %v1224 = vsel %vm134, %v1222, 0.0
    %1225 = vadd.xlane.f32.xlu0 %v1224
    %v1226 = vpop.xlane.xlu0 %1225
    %v1227 = vsel %vm134, %v1223, 0.0
    %1228 = vadd.xlane.f32.xlu0 %v1227
    %v1229 = vpop.xlane.xlu0 %1228
    %v1230 = vmul.f32 %v1226, %v1106
    %v1231 = vmul.f32 %v1229, %v1106
    %v1232 = vsub.f32 %v1222, %v1230
    %v1233 = vsub.f32 %v1223, %v1231
    %v1234 = vmul.f32 %v1232, %v1232
    %v1235 = vmul.f32 %v1233, %v1233
    %v1236 = vsel %vm134, %v1234, 0.0
    %1237 = vadd.xlane.f32.xlu0 %v1236
    %v1238 = vpop.xlane.xlu0 %1237
    %v1239 = vsel %vm134, %v1235, 0.0
    %1240 = vadd.xlane.f32.xlu0 %v1239
    %v1241 = vpop.xlane.xlu0 %1240
    %v1242 = vmul.f32 %v1238, %v1106
    %v1243 = vmul.f32 %v1241, %v1106
    %v1244 = vadd.f32 %v1242, 1e-05
    %v1245 = vadd.f32 %v1243, 1e-05
    %v1246 = vrsqrt.pop %v1244
    %v1247 = vmul.f32 %v1246, %v1244
    %v1248 = vmul.f32 %v1247, %v1246
    %v1249 = vmul.f32 0.5, %v1248
    %v1250 = vsub.f32 1.5, %v1249
    %v1251 = vmul.f32 %v1246, %v1250
    %vm1252 = vweird.f32 %v1244
    %vm1253 = vweird.f32 %v1246
    %vm1254 = vmor %vm1252, %vm1253
    %v1255 = vsel %vm1254, %v1246, %v1251
    %v1256 = vrsqrt.pop %v1245
    %v1257 = vmul.f32 %v1256, %v1245
    %v1258 = vmul.f32 %v1257, %v1256
    %v1259 = vmul.f32 0.5, %v1258
    %v1260 = vsub.f32 1.5, %v1259
    %v1261 = vmul.f32 %v1256, %v1260
    %vm1262 = vweird.f32 %v1245
    %vm1263 = vweird.f32 %v1256
    %vm1264 = vmor %vm1262, %vm1263
    %v1265 = vsel %vm1264, %v1256, %v1261
    %v1266 = vmul.f32 %v1232, %v1255
    %v1267 = vmul.f32 %v1233, %v1265
    %1268 = vrot.lane.b32.xlu0 %v1190, 96
    %v1269 = vpop.permute.xlu0 %1268
    %v1271 = vmul.f32 %v1266, %v1269
    %v1272 = vmul.f32 %v1267, %v1269
    %1273 = vrot.lane.b32.xlu0 %v1190, 64
    %v1274 = vpop.permute.xlu0 %1273
    %v1276 = vadd.f32 %v1271, %v1274
    %v1277 = vadd.f32 %v1272, %v1274
    %1278 = vst.msk [vmem:[#allocation10] sm:$0xff] %vm134, %v1276
    %1279 = vst.msk [vmem:[#allocation10 + $0x8] sm:$0xff] %vm134, %v1277
    // Predicated region
    $region50: #{tpu_custom_call.1} parent=1 // pred_check
      _
    $region51: #{tpu_custom_call.1} parent=1 // pred_check_branch
      %1281 = sbr.rel (0) target = $region53
    $region52: #{tpu_custom_call.1} parent=1 // pred_region
      %1283 = vsyncadd [#allocation4], 0
      %s1284 = sshll.u32 [#allocation10], 4
      %s1285 = int_to_ptr.vmem [resolvable:$true] %s1284
      %s1286 = sshll.u32 %s8, 4
      %s1287 = int_to_ptr.hbm [resolvable:$true] %s1286
      %1292 = dma.vmem_to_hbm [thread:$0]  %s1285, 256, %s1287, [#allocation4], 128, 128, 8
    $region53: #{tpu_custom_call.1} parent=1 // pred_fallthru
      _
    // Predicated region
    $region54: #{tpu_custom_call.1} parent=1 // pred_check
      _
    $region55: #{tpu_custom_call.1} parent=1 // pred_check_branch
      %1294 = sbr.rel (0) target = $region57
    $region56: #{tpu_custom_call.1} parent=1 // pred_region
      %1296 = vsyncadd [#allocation12], 0
      %s1297 = sshll.u32 [#allocation11], 4
      %s1298 = int_to_ptr.vmem [resolvable:$true] %s1297
      %s1299 = sshll.u32 %s9, 4
      %s1300 = int_to_ptr.hbm [resolvable:$true] %s1299
      %1305 = dma.vmem_to_hbm [thread:$0]  %s1298, 256, %s1300, [#allocation12], 128, 128, 8
    $region57: #{tpu_custom_call.1} parent=1 // pred_fallthru
      _
    // Predicated region
    $region58: #{tpu_custom_call.1} parent=1 // pred_check
      _
    $region59: #{tpu_custom_call.1} parent=1 // pred_check_branch
      %1307 = sbr.rel (0) target = $region61
    $region60: #{tpu_custom_call.1} parent=1 // pred_region
      %1309 = dma.done [#allocation4], 256
    $region61: #{tpu_custom_call.1} parent=1 // pred_fallthru
      _
    // Predicated region
    $region62: #{tpu_custom_call.1} parent=1 // pred_check
      _
    $region63: #{tpu_custom_call.1} parent=1 // pred_check_branch
      %1311 = sbr.rel (0) target = $region65
    $region64: #{tpu_custom_call.1} parent=1 // pred_region
      %1313 = dma.done [#allocation12], 256
    $region65: #{tpu_custom_call.1} parent=1 // pred_fallthru
      _
    %1314 = vsyncpa [#allocation3], 1
    %1315 = vsyncpa [#allocation6], 1
    %1316 = vsyncpa [#allocation9], 1
    %1317 = vsyncpa [#allocation4], 1
    %1318 = vsyncpa [#allocation12], 1

</llo_original>
